<compile_context>
chip_gen: v6e
topology: v6e:2x2x1
jax: 0.10.0
libtpu: 0.0.40
codegen_flags: <defaults>
</compile_context>

<pallas_src>
import jax
import jax.numpy as jnp
from jax.experimental import pallas as pl
from jax.experimental.pallas import tpu as pltpu


def _approx_emd_kernel(p_ref, t_ref, out_ref):
    p = p_ref[...].astype(jnp.float32)      # (D, N, bt)  batch on lanes
    t = t_ref[...].astype(jnp.float32)      # (D, N, bt)
    D, N, Bt = p.shape
    eps = 1e-9

    # pw[n, m, b] = sum_d (p[d, n, b] - t[d, m, b])^2  -- pure VPU, no MXU / transposes.
    diff = p[0][:, None, :] - t[0][None, :, :]          # (N, N, bt)
    pw = diff * diff
    for d in range(1, D):
        diff = p[d][:, None, :] - t[d][None, :, :]
        pw = pw + diff * diff

    match = jnp.zeros_like(pw)
    currency = jnp.ones((N, 1, Bt), jnp.float32)         # per pred point (row) budget
    cost = jnp.ones((1, N, Bt), jnp.float32)             # per label point (col) budget

    def recip(x):
        # EUP approx reciprocal + one Newton step on the small reduced shape -> ~exact,
        # and the expensive per-column divide becomes broadcast multiplies.
        inv = pl.reciprocal(x, approx=True)
        return inv * (2.0 - x * inv)

    # Auction rounds i = 7, 6, ..., 0, -1 (decreasing temperature).  All per-column
    # factors are folded onto reduced (1, N, bt) shapes; the only N^2 passes per round
    # are: exp, er = e*currency, bids = er*f, match += bids, and the two column reduces
    # plus the row reduce.
    for i in range(7, -2, -1):
        e = jnp.exp((-(4.0 ** i)) * pw)                              # (N, N, bt)
        se = jnp.sum(e, axis=0, keepdims=True)                       # (1, N, bt)
        g = cost * recip(cost * se + eps)                            # (1, N, bt)
        er = e * currency                                            # (N, N, bt)
        ser = jnp.sum(er, axis=0, keepdims=True)                     # (1, N, bt)
        bid_wt = jnp.minimum(cost * recip(g * ser + eps), 1.0)       # (1, N, bt)
        f = g * bid_wt                                               # (1, N, bt)
        bids = er * f                                                # (N, N, bt)
        match = match + bids
        # column sum of bids == f * ser exactly (reassociation): no extra N^2 reduce.
        cost = jnp.maximum(cost - f * ser, 0.0)
        currency = jnp.maximum(currency - jnp.sum(bids, axis=1, keepdims=True), 0.0)

    # Last round (i = -2): exp factor is 0, so e == 1 everywhere and the pre-scaling
    # bids are rank-1.  Every column quantity collapses to reduced-shape math; only the
    # outer product bids = currency (x) f and match += bids are N^2 work, and the final
    # cost / currency updates are dead.
    g = cost * recip(cost * float(N) + eps)                          # (1, N, bt)
    ser = jnp.sum(currency, axis=0, keepdims=True)                   # (1, 1, bt)
    bid_wt = jnp.minimum(cost * recip(g * ser + eps), 1.0)           # (1, N, bt)
    f = g * bid_wt                                                   # (1, N, bt)
    match = match + currency * f                                     # (N, N, bt)

    # Per-lane (per point set) matching cost; padded lanes have pw == 0 -> contribute 0.
    out_ref[...] = jnp.sum(match * pw, axis=(0, 1), keepdims=True)


def _round_up(x, m):
    return ((x + m - 1) // m) * m


def _est_vmem_bytes(N, D, bt):
    """Rough per-step VMEM estimate for the kernel at batch tile `bt` (all f32)."""
    n2 = N * N * bt * 4                      # one (N, N, bt) buffer
    live_n2 = 6                              # pw, match, e, er, bids + temp/spill slack
    inputs = 2 * 2 * D * N * bt * 4          # 2 inputs, double-buffered by BlockSpec
    outputs = 2 * 1 * 1 * bt * 4
    reduced = 8 * N * bt * 4                 # cost / currency / column temporaries
    return live_n2 * n2 + inputs + outputs + reduced


_VMEM_BUDGET = 20 * 1024 * 1024   # keep the estimate under this
_VMEM_LIMIT = 32 * 1024 * 1024    # explicit scoped-VMEM request: safe on v5e/v6e/v7x


def approx_emd(preds, labels):
    B, N, D = preds.shape
    assert labels.shape == (B, N, D), "preds/labels must both be (B, N, D)"

    lane = 128
    if _est_vmem_bytes(N, D, lane) > _VMEM_BUDGET:
        # TODO(synk): tile the auction over label-column blocks for large point clouds
        # (N >~ 80); the (N, N, 128) working set no longer fits the per-step budget.
        raise NotImplementedError(
            f"approx_emd: N={N} requires label-column tiling; (N, N, 128) working set "
            f"exceeds the per-step VMEM budget ({_VMEM_BUDGET} bytes).")

    b128 = _round_up(B, lane)
    # Largest lane-dense batch tile that fits the VMEM budget (amortizes the ~0.35us
    # per-step fixed cost; the kernel is VALU/EUP-bound so bigger tiles are pure win)...
    bt = lane
    while (bt + lane) <= min(2048, b128) and _est_vmem_bytes(N, D, bt + lane) <= _VMEM_BUDGET:
        bt += lane
    # ...but keep at least 2 grid steps whenever the batch allows it, so the "parallel"
    # grid axis can shard across v7x's two TensorCores.
    if b128 >= 2 * lane:
        bt = min(bt, _round_up(b128 // 2, lane))

    Bp = _round_up(B, bt)
    grid = Bp // bt

    # (B, N, D) -> (D, N, B): batch on lanes, points on sublanes.
    p = jnp.transpose(preds.astype(jnp.float32), (2, 1, 0))
    t = jnp.transpose(labels.astype(jnp.float32), (2, 1, 0))
    if Bp != B:
        pad = ((0, 0), (0, 0), (0, Bp - B))
        p = jnp.pad(p, pad)   # zero point sets: pw == 0 -> contribute 0 to the total
        t = jnp.pad(t, pad)

    partial = pl.pallas_call(
        _approx_emd_kernel,
        out_shape=jax.ShapeDtypeStruct((grid, 1, bt), jnp.float32),
        grid_spec=pltpu.PrefetchScalarGridSpec(
            num_scalar_prefetch=0,
            grid=(grid,),
            in_specs=[
                pl.BlockSpec((D, N, bt), lambda g: (0, 0, g)),
                pl.BlockSpec((D, N, bt), lambda g: (0, 0, g)),
            ],
            out_specs=pl.BlockSpec((1, 1, bt), lambda g: (g, 0, 0)),
        ),
        compiler_params=pltpu.CompilerParams(
            dimension_semantics=("parallel",),   # disjoint partials -> megacore-friendly
            vmem_limit_bytes=_VMEM_LIMIT,
        ),
    )(p, t)
    return jnp.sum(partial)


def _approx_emd_ref(preds, labels):
    """Pure-JAX reference mirroring the PyTorch ApproxEMD module (for verification)."""
    p_norm = jnp.sum(preds ** 2, -1)[..., :, None]
    t_norm = jnp.sum(labels ** 2, -1)[..., None, :]
    pw = p_norm + t_norm - 2.0 * jnp.einsum('bnd,bmd->bnm', preds, labels)
    B, N, _ = pw.shape
    match = jnp.zeros_like(pw)
    currency = jnp.ones((B, N, 1), pw.dtype)
    cost = jnp.ones((B, 1, N), pw.dtype)
    for i in range(7, -3, -1):
        factor = 0.0 if i == -2 else -(4.0 ** i)
        bids = jnp.exp(factor * pw) * cost
        bids = bids * currency / (jnp.sum(bids, 1, keepdims=True) + 1e-9)
        bid_wt = jnp.minimum(cost / (jnp.sum(bids, 1, keepdims=True) + 1e-9), 1.0)
        bids = bids * bid_wt
        match = match + bids
        cost = jnp.maximum(cost - jnp.sum(bids, 1, keepdims=True), 0.0)
        currency = jnp.maximum(currency - jnp.sum(bids, 2, keepdims=True), 0.0)
    return jnp.sum(match * pw)


if __name__ == "__main__":
    key = jax.random.PRNGKey(0)

    # Small canonical case: batch of 2 point sets, 8 points each, 3-D points.
    k1, k2 = jax.random.split(key)
    B, N, D = 2, 8, 3
    preds = jax.random.normal(k1, (B, N, D), dtype=jnp.float32)
    labels = jax.random.normal(k2, (B, N, D), dtype=jnp.float32)
    out = jax.block_until_ready(approx_emd(preds, labels))
    ref = _approx_emd_ref(preds, labels)
    assert jnp.allclose(out, ref, rtol=1e-2, atol=1e-3), (out, ref)

    # Second case exercising batch padding and a >= 2-step "parallel" grid.
    k3, k4 = jax.random.split(jax.random.PRNGKey(1))
    B2 = 130
    preds2 = jax.random.normal(k3, (B2, N, D), dtype=jnp.float32)
    labels2 = jax.random.normal(k4, (B2, N, D), dtype=jnp.float32)
    out2 = jax.block_until_ready(approx_emd(preds2, labels2))
    ref2 = _approx_emd_ref(preds2, labels2)
    assert jnp.allclose(out2, ref2, rtol=1e-2, atol=1e-3), (out2, ref2)

    print("KERNEL_OK")
</pallas_src>

<mosaic_0001>
module attributes {stable_mosaic.version = 11 : i64} {
  func.func @_approx_emd_kernel(%arg0: i32, %arg1: memref<3x8x128xf32, #tpu.memory_space<vmem>>, %arg2: memref<3x8x128xf32, #tpu.memory_space<vmem>>, %arg3: memref<1x1x128xf32, #tpu.memory_space<vmem>>) attributes {dimension_semantics = [#tpu.dimension_semantics<parallel>], iteration_bounds = array<i64: 1>, scalar_prefetch = 0 : i64, scratch_operands = 0 : i64, tpu.core_type = #tpu.core_type<tc>, window_params = [{transform_indices = @transform_0, window_bounds = array<i64: 3, 8, 128>}, {transform_indices = @transform_1, window_bounds = array<i64: 3, 8, 128>}, {transform_indices = @transform_2, window_bounds = array<i64: 1, 1, 128>}]} {
    %c0 = arith.constant 0 : index
    %c0_0 = arith.constant 0 : index
    %c0_1 = arith.constant 0 : index
    %0 = vector.load %arg1[%c0, %c0_0, %c0_1] : memref<3x8x128xf32, #tpu.memory_space<vmem>>, vector<3x8x128xf32>
    %c0_2 = arith.constant 0 : index
    %c0_3 = arith.constant 0 : index
    %c0_4 = arith.constant 0 : index
    %1 = vector.load %arg2[%c0_2, %c0_3, %c0_4] : memref<3x8x128xf32, #tpu.memory_space<vmem>>, vector<3x8x128xf32>
    %2 = vector.extract_strided_slice %0 {offsets = [0, 0, 0], sizes = [1, 8, 128], strides = [1, 1, 1]} : vector<3x8x128xf32> to vector<1x8x128xf32>
    %3 = vector.shape_cast %2 : vector<1x8x128xf32> to vector<8x128xf32>
    %4 = vector.shape_cast %3 : vector<8x128xf32> to vector<8x1x128xf32>
    %5 = vector.extract_strided_slice %1 {offsets = [0, 0, 0], sizes = [1, 8, 128], strides = [1, 1, 1]} : vector<3x8x128xf32> to vector<1x8x128xf32>
    %6 = vector.shape_cast %5 : vector<1x8x128xf32> to vector<8x128xf32>
    %7 = vector.shape_cast %6 : vector<8x128xf32> to vector<1x8x128xf32>
    %8 = vector.broadcast %4 : vector<8x1x128xf32> to vector<8x8x128xf32>
    %9 = vector.broadcast %7 : vector<1x8x128xf32> to vector<8x8x128xf32>
    %10 = arith.subf %8, %9 : vector<8x8x128xf32>
    %11 = arith.mulf %10, %10 : vector<8x8x128xf32>
    %12 = vector.extract_strided_slice %0 {offsets = [1, 0, 0], sizes = [1, 8, 128], strides = [1, 1, 1]} : vector<3x8x128xf32> to vector<1x8x128xf32>
    %13 = vector.shape_cast %12 : vector<1x8x128xf32> to vector<8x128xf32>
    %14 = vector.shape_cast %13 : vector<8x128xf32> to vector<8x1x128xf32>
    %15 = vector.extract_strided_slice %1 {offsets = [1, 0, 0], sizes = [1, 8, 128], strides = [1, 1, 1]} : vector<3x8x128xf32> to vector<1x8x128xf32>
    %16 = vector.shape_cast %15 : vector<1x8x128xf32> to vector<8x128xf32>
    %17 = vector.shape_cast %16 : vector<8x128xf32> to vector<1x8x128xf32>
    %18 = vector.broadcast %14 : vector<8x1x128xf32> to vector<8x8x128xf32>
    %19 = vector.broadcast %17 : vector<1x8x128xf32> to vector<8x8x128xf32>
    %20 = arith.subf %18, %19 : vector<8x8x128xf32>
    %21 = arith.mulf %20, %20 : vector<8x8x128xf32>
    %22 = arith.addf %11, %21 : vector<8x8x128xf32>
    %23 = vector.extract_strided_slice %0 {offsets = [2, 0, 0], sizes = [1, 8, 128], strides = [1, 1, 1]} : vector<3x8x128xf32> to vector<1x8x128xf32>
    %24 = vector.shape_cast %23 : vector<1x8x128xf32> to vector<8x128xf32>
    %25 = vector.shape_cast %24 : vector<8x128xf32> to vector<8x1x128xf32>
    %26 = vector.extract_strided_slice %1 {offsets = [2, 0, 0], sizes = [1, 8, 128], strides = [1, 1, 1]} : vector<3x8x128xf32> to vector<1x8x128xf32>
    %27 = vector.shape_cast %26 : vector<1x8x128xf32> to vector<8x128xf32>
    %28 = vector.shape_cast %27 : vector<8x128xf32> to vector<1x8x128xf32>
    %29 = vector.broadcast %25 : vector<8x1x128xf32> to vector<8x8x128xf32>
    %30 = vector.broadcast %28 : vector<1x8x128xf32> to vector<8x8x128xf32>
    %31 = arith.subf %29, %30 : vector<8x8x128xf32>
    %32 = arith.mulf %31, %31 : vector<8x8x128xf32>
    %33 = arith.addf %22, %32 : vector<8x8x128xf32>
    %cst = arith.constant 0.000000e+00 : f32
    %34 = vector.broadcast %cst : f32 to vector<8x8x128xf32>
    %cst_5 = arith.constant 1.000000e+00 : f32
    %35 = vector.broadcast %cst_5 : f32 to vector<8x1x128xf32>
    %cst_6 = arith.constant 1.000000e+00 : f32
    %36 = vector.broadcast %cst_6 : f32 to vector<1x8x128xf32>
    %cst_7 = arith.constant -1.638400e+04 : f32
    %37 = vector.broadcast %cst_7 : f32 to vector<8x8x128xf32>
    %38 = arith.mulf %37, %33 : vector<8x8x128xf32>
    %39 = math.exp %38 : vector<8x8x128xf32>
    %cst_8 = arith.constant dense<0.000000e+00> : vector<8x128xf32>
    %40 = vector.multi_reduction <add>, %39, %cst_8 [0] : vector<8x8x128xf32> to vector<8x128xf32>
    %41 = vector.shape_cast %40 : vector<8x128xf32> to vector<1x8x128xf32>
    %42 = arith.mulf %36, %41 : vector<1x8x128xf32>
    %cst_9 = arith.constant 9.99999971E-10 : f32
    %43 = vector.broadcast %cst_9 : f32 to vector<1x8x128xf32>
    %44 = arith.addf %42, %43 : vector<1x8x128xf32>
    %45 = tpu.reciprocal %44 {approx = true} : vector<1x8x128xf32> -> vector<1x8x128xf32>
    %46 = arith.mulf %44, %45 : vector<1x8x128xf32>
    %cst_10 = arith.constant 2.000000e+00 : f32
    %47 = vector.broadcast %cst_10 : f32 to vector<1x8x128xf32>
    %48 = arith.subf %47, %46 : vector<1x8x128xf32>
    %49 = arith.mulf %45, %48 : vector<1x8x128xf32>
    %50 = arith.mulf %36, %49 : vector<1x8x128xf32>
    %51 = vector.broadcast %35 : vector<8x1x128xf32> to vector<8x8x128xf32>
    %52 = arith.mulf %39, %51 : vector<8x8x128xf32>
    %cst_11 = arith.constant dense<0.000000e+00> : vector<8x128xf32>
    %53 = vector.multi_reduction <add>, %52, %cst_11 [0] : vector<8x8x128xf32> to vector<8x128xf32>
    %54 = vector.shape_cast %53 : vector<8x128xf32> to vector<1x8x128xf32>
    %55 = arith.mulf %50, %54 : vector<1x8x128xf32>
    %cst_12 = arith.constant 9.99999971E-10 : f32
    %56 = vector.broadcast %cst_12 : f32 to vector<1x8x128xf32>
    %57 = arith.addf %55, %56 : vector<1x8x128xf32>
    %58 = tpu.reciprocal %57 {approx = true} : vector<1x8x128xf32> -> vector<1x8x128xf32>
    %59 = arith.mulf %57, %58 : vector<1x8x128xf32>
    %cst_13 = arith.constant 2.000000e+00 : f32
    %60 = vector.broadcast %cst_13 : f32 to vector<1x8x128xf32>
    %61 = arith.subf %60, %59 : vector<1x8x128xf32>
    %62 = arith.mulf %58, %61 : vector<1x8x128xf32>
    %63 = arith.mulf %36, %62 : vector<1x8x128xf32>
    %cst_14 = arith.constant 1.000000e+00 : f32
    %64 = vector.broadcast %cst_14 : f32 to vector<1x8x128xf32>
    %65 = arith.minimumf %63, %64 : vector<1x8x128xf32>
    %66 = arith.mulf %50, %65 : vector<1x8x128xf32>
    %67 = vector.broadcast %66 : vector<1x8x128xf32> to vector<8x8x128xf32>
    %68 = arith.mulf %52, %67 : vector<8x8x128xf32>
    %69 = arith.addf %34, %68 : vector<8x8x128xf32>
    %70 = arith.mulf %66, %54 : vector<1x8x128xf32>
    %71 = arith.subf %36, %70 : vector<1x8x128xf32>
    %cst_15 = arith.constant 0.000000e+00 : f32
    %72 = vector.broadcast %cst_15 : f32 to vector<1x8x128xf32>
    %73 = arith.maximumf %71, %72 : vector<1x8x128xf32>
    %cst_16 = arith.constant dense<0.000000e+00> : vector<8x128xf32>
    %74 = vector.multi_reduction <add>, %68, %cst_16 [1] : vector<8x8x128xf32> to vector<8x128xf32>
    %75 = vector.shape_cast %74 : vector<8x128xf32> to vector<8x1x128xf32>
    %76 = arith.subf %35, %75 : vector<8x1x128xf32>
    %cst_17 = arith.constant 0.000000e+00 : f32
    %77 = vector.broadcast %cst_17 : f32 to vector<8x1x128xf32>
    %78 = arith.maximumf %76, %77 : vector<8x1x128xf32>
    %cst_18 = arith.constant -4.096000e+03 : f32
    %79 = vector.broadcast %cst_18 : f32 to vector<8x8x128xf32>
    %80 = arith.mulf %79, %33 : vector<8x8x128xf32>
    %81 = math.exp %80 : vector<8x8x128xf32>
    %cst_19 = arith.constant dense<0.000000e+00> : vector<8x128xf32>
    %82 = vector.multi_reduction <add>, %81, %cst_19 [0] : vector<8x8x128xf32> to vector<8x128xf32>
    %83 = vector.shape_cast %82 : vector<8x128xf32> to vector<1x8x128xf32>
    %84 = arith.mulf %73, %83 : vector<1x8x128xf32>
    %cst_20 = arith.constant 9.99999971E-10 : f32
    %85 = vector.broadcast %cst_20 : f32 to vector<1x8x128xf32>
    %86 = arith.addf %84, %85 : vector<1x8x128xf32>
    %87 = tpu.reciprocal %86 {approx = true} : vector<1x8x128xf32> -> vector<1x8x128xf32>
    %88 = arith.mulf %86, %87 : vector<1x8x128xf32>
    %cst_21 = arith.constant 2.000000e+00 : f32
    %89 = vector.broadcast %cst_21 : f32 to vector<1x8x128xf32>
    %90 = arith.subf %89, %88 : vector<1x8x128xf32>
    %91 = arith.mulf %87, %90 : vector<1x8x128xf32>
    %92 = arith.mulf %73, %91 : vector<1x8x128xf32>
    %93 = vector.broadcast %78 : vector<8x1x128xf32> to vector<8x8x128xf32>
    %94 = arith.mulf %81, %93 : vector<8x8x128xf32>
    %cst_22 = arith.constant dense<0.000000e+00> : vector<8x128xf32>
    %95 = vector.multi_reduction <add>, %94, %cst_22 [0] : vector<8x8x128xf32> to vector<8x128xf32>
    %96 = vector.shape_cast %95 : vector<8x128xf32> to vector<1x8x128xf32>
    %97 = arith.mulf %92, %96 : vector<1x8x128xf32>
    %cst_23 = arith.constant 9.99999971E-10 : f32
    %98 = vector.broadcast %cst_23 : f32 to vector<1x8x128xf32>
    %99 = arith.addf %97, %98 : vector<1x8x128xf32>
    %100 = tpu.reciprocal %99 {approx = true} : vector<1x8x128xf32> -> vector<1x8x128xf32>
    %101 = arith.mulf %99, %100 : vector<1x8x128xf32>
    %cst_24 = arith.constant 2.000000e+00 : f32
    %102 = vector.broadcast %cst_24 : f32 to vector<1x8x128xf32>
    %103 = arith.subf %102, %101 : vector<1x8x128xf32>
    %104 = arith.mulf %100, %103 : vector<1x8x128xf32>
    %105 = arith.mulf %73, %104 : vector<1x8x128xf32>
    %cst_25 = arith.constant 1.000000e+00 : f32
    %106 = vector.broadcast %cst_25 : f32 to vector<1x8x128xf32>
    %107 = arith.minimumf %105, %106 : vector<1x8x128xf32>
    %108 = arith.mulf %92, %107 : vector<1x8x128xf32>
    %109 = vector.broadcast %108 : vector<1x8x128xf32> to vector<8x8x128xf32>
    %110 = arith.mulf %94, %109 : vector<8x8x128xf32>
    %111 = arith.addf %69, %110 : vector<8x8x128xf32>
    %112 = arith.mulf %108, %96 : vector<1x8x128xf32>
    %113 = arith.subf %73, %112 : vector<1x8x128xf32>
    %cst_26 = arith.constant 0.000000e+00 : f32
    %114 = vector.broadcast %cst_26 : f32 to vector<1x8x128xf32>
    %115 = arith.maximumf %113, %114 : vector<1x8x128xf32>
    %cst_27 = arith.constant dense<0.000000e+00> : vector<8x128xf32>
    %116 = vector.multi_reduction <add>, %110, %cst_27 [1] : vector<8x8x128xf32> to vector<8x128xf32>
    %117 = vector.shape_cast %116 : vector<8x128xf32> to vector<8x1x128xf32>
    %118 = arith.subf %78, %117 : vector<8x1x128xf32>
    %cst_28 = arith.constant 0.000000e+00 : f32
    %119 = vector.broadcast %cst_28 : f32 to vector<8x1x128xf32>
    %120 = arith.maximumf %118, %119 : vector<8x1x128xf32>
    %cst_29 = arith.constant -1.024000e+03 : f32
    %121 = vector.broadcast %cst_29 : f32 to vector<8x8x128xf32>
    %122 = arith.mulf %121, %33 : vector<8x8x128xf32>
    %123 = math.exp %122 : vector<8x8x128xf32>
    %cst_30 = arith.constant dense<0.000000e+00> : vector<8x128xf32>
    %124 = vector.multi_reduction <add>, %123, %cst_30 [0] : vector<8x8x128xf32> to vector<8x128xf32>
    %125 = vector.shape_cast %124 : vector<8x128xf32> to vector<1x8x128xf32>
    %126 = arith.mulf %115, %125 : vector<1x8x128xf32>
    %cst_31 = arith.constant 9.99999971E-10 : f32
    %127 = vector.broadcast %cst_31 : f32 to vector<1x8x128xf32>
    %128 = arith.addf %126, %127 : vector<1x8x128xf32>
    %129 = tpu.reciprocal %128 {approx = true} : vector<1x8x128xf32> -> vector<1x8x128xf32>
    %130 = arith.mulf %128, %129 : vector<1x8x128xf32>
    %cst_32 = arith.constant 2.000000e+00 : f32
    %131 = vector.broadcast %cst_32 : f32 to vector<1x8x128xf32>
    %132 = arith.subf %131, %130 : vector<1x8x128xf32>
    %133 = arith.mulf %129, %132 : vector<1x8x128xf32>
    %134 = arith.mulf %115, %133 : vector<1x8x128xf32>
    %135 = vector.broadcast %120 : vector<8x1x128xf32> to vector<8x8x128xf32>
    %136 = arith.mulf %123, %135 : vector<8x8x128xf32>
    %cst_33 = arith.constant dense<0.000000e+00> : vector<8x128xf32>
    %137 = vector.multi_reduction <add>, %136, %cst_33 [0] : vector<8x8x128xf32> to vector<8x128xf32>
    %138 = vector.shape_cast %137 : vector<8x128xf32> to vector<1x8x128xf32>
    %139 = arith.mulf %134, %138 : vector<1x8x128xf32>
    %cst_34 = arith.constant 9.99999971E-10 : f32
    %140 = vector.broadcast %cst_34 : f32 to vector<1x8x128xf32>
    %141 = arith.addf %139, %140 : vector<1x8x128xf32>
    %142 = tpu.reciprocal %141 {approx = true} : vector<1x8x128xf32> -> vector<1x8x128xf32>
    %143 = arith.mulf %141, %142 : vector<1x8x128xf32>
    %cst_35 = arith.constant 2.000000e+00 : f32
    %144 = vector.broadcast %cst_35 : f32 to vector<1x8x128xf32>
    %145 = arith.subf %144, %143 : vector<1x8x128xf32>
    %146 = arith.mulf %142, %145 : vector<1x8x128xf32>
    %147 = arith.mulf %115, %146 : vector<1x8x128xf32>
    %cst_36 = arith.constant 1.000000e+00 : f32
    %148 = vector.broadcast %cst_36 : f32 to vector<1x8x128xf32>
    %149 = arith.minimumf %147, %148 : vector<1x8x128xf32>
    %150 = arith.mulf %134, %149 : vector<1x8x128xf32>
    %151 = vector.broadcast %150 : vector<1x8x128xf32> to vector<8x8x128xf32>
    %152 = arith.mulf %136, %151 : vector<8x8x128xf32>
    %153 = arith.addf %111, %152 : vector<8x8x128xf32>
    %154 = arith.mulf %150, %138 : vector<1x8x128xf32>
    %155 = arith.subf %115, %154 : vector<1x8x128xf32>
    %cst_37 = arith.constant 0.000000e+00 : f32
    %156 = vector.broadcast %cst_37 : f32 to vector<1x8x128xf32>
    %157 = arith.maximumf %155, %156 : vector<1x8x128xf32>
    %cst_38 = arith.constant dense<0.000000e+00> : vector<8x128xf32>
    %158 = vector.multi_reduction <add>, %152, %cst_38 [1] : vector<8x8x128xf32> to vector<8x128xf32>
    %159 = vector.shape_cast %158 : vector<8x128xf32> to vector<8x1x128xf32>
    %160 = arith.subf %120, %159 : vector<8x1x128xf32>
    %cst_39 = arith.constant 0.000000e+00 : f32
    %161 = vector.broadcast %cst_39 : f32 to vector<8x1x128xf32>
    %162 = arith.maximumf %160, %161 : vector<8x1x128xf32>
    %cst_40 = arith.constant -2.560000e+02 : f32
    %163 = vector.broadcast %cst_40 : f32 to vector<8x8x128xf32>
    %164 = arith.mulf %163, %33 : vector<8x8x128xf32>
    %165 = math.exp %164 : vector<8x8x128xf32>
    %cst_41 = arith.constant dense<0.000000e+00> : vector<8x128xf32>
    %166 = vector.multi_reduction <add>, %165, %cst_41 [0] : vector<8x8x128xf32> to vector<8x128xf32>
    %167 = vector.shape_cast %166 : vector<8x128xf32> to vector<1x8x128xf32>
    %168 = arith.mulf %157, %167 : vector<1x8x128xf32>
    %cst_42 = arith.constant 9.99999971E-10 : f32
    %169 = vector.broadcast %cst_42 : f32 to vector<1x8x128xf32>
    %170 = arith.addf %168, %169 : vector<1x8x128xf32>
    %171 = tpu.reciprocal %170 {approx = true} : vector<1x8x128xf32> -> vector<1x8x128xf32>
    %172 = arith.mulf %170, %171 : vector<1x8x128xf32>
    %cst_43 = arith.constant 2.000000e+00 : f32
    %173 = vector.broadcast %cst_43 : f32 to vector<1x8x128xf32>
    %174 = arith.subf %173, %172 : vector<1x8x128xf32>
    %175 = arith.mulf %171, %174 : vector<1x8x128xf32>
    %176 = arith.mulf %157, %175 : vector<1x8x128xf32>
    %177 = vector.broadcast %162 : vector<8x1x128xf32> to vector<8x8x128xf32>
    %178 = arith.mulf %165, %177 : vector<8x8x128xf32>
    %cst_44 = arith.constant dense<0.000000e+00> : vector<8x128xf32>
    %179 = vector.multi_reduction <add>, %178, %cst_44 [0] : vector<8x8x128xf32> to vector<8x128xf32>
    %180 = vector.shape_cast %179 : vector<8x128xf32> to vector<1x8x128xf32>
    %181 = arith.mulf %176, %180 : vector<1x8x128xf32>
    %cst_45 = arith.constant 9.99999971E-10 : f32
    %182 = vector.broadcast %cst_45 : f32 to vector<1x8x128xf32>
    %183 = arith.addf %181, %182 : vector<1x8x128xf32>
    %184 = tpu.reciprocal %183 {approx = true} : vector<1x8x128xf32> -> vector<1x8x128xf32>
    %185 = arith.mulf %183, %184 : vector<1x8x128xf32>
    %cst_46 = arith.constant 2.000000e+00 : f32
    %186 = vector.broadcast %cst_46 : f32 to vector<1x8x128xf32>
    %187 = arith.subf %186, %185 : vector<1x8x128xf32>
    %188 = arith.mulf %184, %187 : vector<1x8x128xf32>
    %189 = arith.mulf %157, %188 : vector<1x8x128xf32>
    %cst_47 = arith.constant 1.000000e+00 : f32
    %190 = vector.broadcast %cst_47 : f32 to vector<1x8x128xf32>
    %191 = arith.minimumf %189, %190 : vector<1x8x128xf32>
    %192 = arith.mulf %176, %191 : vector<1x8x128xf32>
    %193 = vector.broadcast %192 : vector<1x8x128xf32> to vector<8x8x128xf32>
    %194 = arith.mulf %178, %193 : vector<8x8x128xf32>
    %195 = arith.addf %153, %194 : vector<8x8x128xf32>
    %196 = arith.mulf %192, %180 : vector<1x8x128xf32>
    %197 = arith.subf %157, %196 : vector<1x8x128xf32>
    %cst_48 = arith.constant 0.000000e+00 : f32
    %198 = vector.broadcast %cst_48 : f32 to vector<1x8x128xf32>
    %199 = arith.maximumf %197, %198 : vector<1x8x128xf32>
    %cst_49 = arith.constant dense<0.000000e+00> : vector<8x128xf32>
    %200 = vector.multi_reduction <add>, %194, %cst_49 [1] : vector<8x8x128xf32> to vector<8x128xf32>
    %201 = vector.shape_cast %200 : vector<8x128xf32> to vector<8x1x128xf32>
    %202 = arith.subf %162, %201 : vector<8x1x128xf32>
    %cst_50 = arith.constant 0.000000e+00 : f32
    %203 = vector.broadcast %cst_50 : f32 to vector<8x1x128xf32>
    %204 = arith.maximumf %202, %203 : vector<8x1x128xf32>
    %cst_51 = arith.constant -6.400000e+01 : f32
    %205 = vector.broadcast %cst_51 : f32 to vector<8x8x128xf32>
    %206 = arith.mulf %205, %33 : vector<8x8x128xf32>
    %207 = math.exp %206 : vector<8x8x128xf32>
    %cst_52 = arith.constant dense<0.000000e+00> : vector<8x128xf32>
    %208 = vector.multi_reduction <add>, %207, %cst_52 [0] : vector<8x8x128xf32> to vector<8x128xf32>
    %209 = vector.shape_cast %208 : vector<8x128xf32> to vector<1x8x128xf32>
    %210 = arith.mulf %199, %209 : vector<1x8x128xf32>
    %cst_53 = arith.constant 9.99999971E-10 : f32
    %211 = vector.broadcast %cst_53 : f32 to vector<1x8x128xf32>
    %212 = arith.addf %210, %211 : vector<1x8x128xf32>
    %213 = tpu.reciprocal %212 {approx = true} : vector<1x8x128xf32> -> vector<1x8x128xf32>
    %214 = arith.mulf %212, %213 : vector<1x8x128xf32>
    %cst_54 = arith.constant 2.000000e+00 : f32
    %215 = vector.broadcast %cst_54 : f32 to vector<1x8x128xf32>
    %216 = arith.subf %215, %214 : vector<1x8x128xf32>
    %217 = arith.mulf %213, %216 : vector<1x8x128xf32>
    %218 = arith.mulf %199, %217 : vector<1x8x128xf32>
    %219 = vector.broadcast %204 : vector<8x1x128xf32> to vector<8x8x128xf32>
    %220 = arith.mulf %207, %219 : vector<8x8x128xf32>
    %cst_55 = arith.constant dense<0.000000e+00> : vector<8x128xf32>
    %221 = vector.multi_reduction <add>, %220, %cst_55 [0] : vector<8x8x128xf32> to vector<8x128xf32>
    %222 = vector.shape_cast %221 : vector<8x128xf32> to vector<1x8x128xf32>
    %223 = arith.mulf %218, %222 : vector<1x8x128xf32>
    %cst_56 = arith.constant 9.99999971E-10 : f32
    %224 = vector.broadcast %cst_56 : f32 to vector<1x8x128xf32>
    %225 = arith.addf %223, %224 : vector<1x8x128xf32>
    %226 = tpu.reciprocal %225 {approx = true} : vector<1x8x128xf32> -> vector<1x8x128xf32>
    %227 = arith.mulf %225, %226 : vector<1x8x128xf32>
    %cst_57 = arith.constant 2.000000e+00 : f32
    %228 = vector.broadcast %cst_57 : f32 to vector<1x8x128xf32>
    %229 = arith.subf %228, %227 : vector<1x8x128xf32>
    %230 = arith.mulf %226, %229 : vector<1x8x128xf32>
    %231 = arith.mulf %199, %230 : vector<1x8x128xf32>
    %cst_58 = arith.constant 1.000000e+00 : f32
    %232 = vector.broadcast %cst_58 : f32 to vector<1x8x128xf32>
    %233 = arith.minimumf %231, %232 : vector<1x8x128xf32>
    %234 = arith.mulf %218, %233 : vector<1x8x128xf32>
    %235 = vector.broadcast %234 : vector<1x8x128xf32> to vector<8x8x128xf32>
    %236 = arith.mulf %220, %235 : vector<8x8x128xf32>
    %237 = arith.addf %195, %236 : vector<8x8x128xf32>
    %238 = arith.mulf %234, %222 : vector<1x8x128xf32>
    %239 = arith.subf %199, %238 : vector<1x8x128xf32>
    %cst_59 = arith.constant 0.000000e+00 : f32
    %240 = vector.broadcast %cst_59 : f32 to vector<1x8x128xf32>
    %241 = arith.maximumf %239, %240 : vector<1x8x128xf32>
    %cst_60 = arith.constant dense<0.000000e+00> : vector<8x128xf32>
    %242 = vector.multi_reduction <add>, %236, %cst_60 [1] : vector<8x8x128xf32> to vector<8x128xf32>
    %243 = vector.shape_cast %242 : vector<8x128xf32> to vector<8x1x128xf32>
    %244 = arith.subf %204, %243 : vector<8x1x128xf32>
    %cst_61 = arith.constant 0.000000e+00 : f32
    %245 = vector.broadcast %cst_61 : f32 to vector<8x1x128xf32>
    %246 = arith.maximumf %244, %245 : vector<8x1x128xf32>
    %cst_62 = arith.constant -1.600000e+01 : f32
    %247 = vector.broadcast %cst_62 : f32 to vector<8x8x128xf32>
    %248 = arith.mulf %247, %33 : vector<8x8x128xf32>
    %249 = math.exp %248 : vector<8x8x128xf32>
    %cst_63 = arith.constant dense<0.000000e+00> : vector<8x128xf32>
    %250 = vector.multi_reduction <add>, %249, %cst_63 [0] : vector<8x8x128xf32> to vector<8x128xf32>
    %251 = vector.shape_cast %250 : vector<8x128xf32> to vector<1x8x128xf32>
    %252 = arith.mulf %241, %251 : vector<1x8x128xf32>
    %cst_64 = arith.constant 9.99999971E-10 : f32
    %253 = vector.broadcast %cst_64 : f32 to vector<1x8x128xf32>
    %254 = arith.addf %252, %253 : vector<1x8x128xf32>
    %255 = tpu.reciprocal %254 {approx = true} : vector<1x8x128xf32> -> vector<1x8x128xf32>
    %256 = arith.mulf %254, %255 : vector<1x8x128xf32>
    %cst_65 = arith.constant 2.000000e+00 : f32
    %257 = vector.broadcast %cst_65 : f32 to vector<1x8x128xf32>
    %258 = arith.subf %257, %256 : vector<1x8x128xf32>
    %259 = arith.mulf %255, %258 : vector<1x8x128xf32>
    %260 = arith.mulf %241, %259 : vector<1x8x128xf32>
    %261 = vector.broadcast %246 : vector<8x1x128xf32> to vector<8x8x128xf32>
    %262 = arith.mulf %249, %261 : vector<8x8x128xf32>
    %cst_66 = arith.constant dense<0.000000e+00> : vector<8x128xf32>
    %263 = vector.multi_reduction <add>, %262, %cst_66 [0] : vector<8x8x128xf32> to vector<8x128xf32>
    %264 = vector.shape_cast %263 : vector<8x128xf32> to vector<1x8x128xf32>
    %265 = arith.mulf %260, %264 : vector<1x8x128xf32>
    %cst_67 = arith.constant 9.99999971E-10 : f32
    %266 = vector.broadcast %cst_67 : f32 to vector<1x8x128xf32>
    %267 = arith.addf %265, %266 : vector<1x8x128xf32>
    %268 = tpu.reciprocal %267 {approx = true} : vector<1x8x128xf32> -> vector<1x8x128xf32>
    %269 = arith.mulf %267, %268 : vector<1x8x128xf32>
    %cst_68 = arith.constant 2.000000e+00 : f32
    %270 = vector.broadcast %cst_68 : f32 to vector<1x8x128xf32>
    %271 = arith.subf %270, %269 : vector<1x8x128xf32>
    %272 = arith.mulf %268, %271 : vector<1x8x128xf32>
    %273 = arith.mulf %241, %272 : vector<1x8x128xf32>
    %cst_69 = arith.constant 1.000000e+00 : f32
    %274 = vector.broadcast %cst_69 : f32 to vector<1x8x128xf32>
    %275 = arith.minimumf %273, %274 : vector<1x8x128xf32>
    %276 = arith.mulf %260, %275 : vector<1x8x128xf32>
    %277 = vector.broadcast %276 : vector<1x8x128xf32> to vector<8x8x128xf32>
    %278 = arith.mulf %262, %277 : vector<8x8x128xf32>
    %279 = arith.addf %237, %278 : vector<8x8x128xf32>
    %280 = arith.mulf %276, %264 : vector<1x8x128xf32>
    %281 = arith.subf %241, %280 : vector<1x8x128xf32>
    %cst_70 = arith.constant 0.000000e+00 : f32
    %282 = vector.broadcast %cst_70 : f32 to vector<1x8x128xf32>
    %283 = arith.maximumf %281, %282 : vector<1x8x128xf32>
    %cst_71 = arith.constant dense<0.000000e+00> : vector<8x128xf32>
    %284 = vector.multi_reduction <add>, %278, %cst_71 [1] : vector<8x8x128xf32> to vector<8x128xf32>
    %285 = vector.shape_cast %284 : vector<8x128xf32> to vector<8x1x128xf32>
    %286 = arith.subf %246, %285 : vector<8x1x128xf32>
    %cst_72 = arith.constant 0.000000e+00 : f32
    %287 = vector.broadcast %cst_72 : f32 to vector<8x1x128xf32>
    %288 = arith.maximumf %286, %287 : vector<8x1x128xf32>
    %cst_73 = arith.constant -4.000000e+00 : f32
    %289 = vector.broadcast %cst_73 : f32 to vector<8x8x128xf32>
    %290 = arith.mulf %289, %33 : vector<8x8x128xf32>
    %291 = math.exp %290 : vector<8x8x128xf32>
    %cst_74 = arith.constant dense<0.000000e+00> : vector<8x128xf32>
    %292 = vector.multi_reduction <add>, %291, %cst_74 [0] : vector<8x8x128xf32> to vector<8x128xf32>
    %293 = vector.shape_cast %292 : vector<8x128xf32> to vector<1x8x128xf32>
    %294 = arith.mulf %283, %293 : vector<1x8x128xf32>
    %cst_75 = arith.constant 9.99999971E-10 : f32
    %295 = vector.broadcast %cst_75 : f32 to vector<1x8x128xf32>
    %296 = arith.addf %294, %295 : vector<1x8x128xf32>
    %297 = tpu.reciprocal %296 {approx = true} : vector<1x8x128xf32> -> vector<1x8x128xf32>
    %298 = arith.mulf %296, %297 : vector<1x8x128xf32>
    %cst_76 = arith.constant 2.000000e+00 : f32
    %299 = vector.broadcast %cst_76 : f32 to vector<1x8x128xf32>
    %300 = arith.subf %299, %298 : vector<1x8x128xf32>
    %301 = arith.mulf %297, %300 : vector<1x8x128xf32>
    %302 = arith.mulf %283, %301 : vector<1x8x128xf32>
    %303 = vector.broadcast %288 : vector<8x1x128xf32> to vector<8x8x128xf32>
    %304 = arith.mulf %291, %303 : vector<8x8x128xf32>
    %cst_77 = arith.constant dense<0.000000e+00> : vector<8x128xf32>
    %305 = vector.multi_reduction <add>, %304, %cst_77 [0] : vector<8x8x128xf32> to vector<8x128xf32>
    %306 = vector.shape_cast %305 : vector<8x128xf32> to vector<1x8x128xf32>
    %307 = arith.mulf %302, %306 : vector<1x8x128xf32>
    %cst_78 = arith.constant 9.99999971E-10 : f32
    %308 = vector.broadcast %cst_78 : f32 to vector<1x8x128xf32>
    %309 = arith.addf %307, %308 : vector<1x8x128xf32>
    %310 = tpu.reciprocal %309 {approx = true} : vector<1x8x128xf32> -> vector<1x8x128xf32>
    %311 = arith.mulf %309, %310 : vector<1x8x128xf32>
    %cst_79 = arith.constant 2.000000e+00 : f32
    %312 = vector.broadcast %cst_79 : f32 to vector<1x8x128xf32>
    %313 = arith.subf %312, %311 : vector<1x8x128xf32>
    %314 = arith.mulf %310, %313 : vector<1x8x128xf32>
    %315 = arith.mulf %283, %314 : vector<1x8x128xf32>
    %cst_80 = arith.constant 1.000000e+00 : f32
    %316 = vector.broadcast %cst_80 : f32 to vector<1x8x128xf32>
    %317 = arith.minimumf %315, %316 : vector<1x8x128xf32>
    %318 = arith.mulf %302, %317 : vector<1x8x128xf32>
    %319 = vector.broadcast %318 : vector<1x8x128xf32> to vector<8x8x128xf32>
    %320 = arith.mulf %304, %319 : vector<8x8x128xf32>
    %321 = arith.addf %279, %320 : vector<8x8x128xf32>
    %322 = arith.mulf %318, %306 : vector<1x8x128xf32>
    %323 = arith.subf %283, %322 : vector<1x8x128xf32>
    %cst_81 = arith.constant 0.000000e+00 : f32
    %324 = vector.broadcast %cst_81 : f32 to vector<1x8x128xf32>
    %325 = arith.maximumf %323, %324 : vector<1x8x128xf32>
    %cst_82 = arith.constant dense<0.000000e+00> : vector<8x128xf32>
    %326 = vector.multi_reduction <add>, %320, %cst_82 [1] : vector<8x8x128xf32> to vector<8x128xf32>
    %327 = vector.shape_cast %326 : vector<8x128xf32> to vector<8x1x128xf32>
    %328 = arith.subf %288, %327 : vector<8x1x128xf32>
    %cst_83 = arith.constant 0.000000e+00 : f32
    %329 = vector.broadcast %cst_83 : f32 to vector<8x1x128xf32>
    %330 = arith.maximumf %328, %329 : vector<8x1x128xf32>
    %cst_84 = arith.constant -1.000000e+00 : f32
    %331 = vector.broadcast %cst_84 : f32 to vector<8x8x128xf32>
    %332 = arith.mulf %331, %33 : vector<8x8x128xf32>
    %333 = math.exp %332 : vector<8x8x128xf32>
    %cst_85 = arith.constant dense<0.000000e+00> : vector<8x128xf32>
    %334 = vector.multi_reduction <add>, %333, %cst_85 [0] : vector<8x8x128xf32> to vector<8x128xf32>
    %335 = vector.shape_cast %334 : vector<8x128xf32> to vector<1x8x128xf32>
    %336 = arith.mulf %325, %335 : vector<1x8x128xf32>
    %cst_86 = arith.constant 9.99999971E-10 : f32
    %337 = vector.broadcast %cst_86 : f32 to vector<1x8x128xf32>
    %338 = arith.addf %336, %337 : vector<1x8x128xf32>
    %339 = tpu.reciprocal %338 {approx = true} : vector<1x8x128xf32> -> vector<1x8x128xf32>
    %340 = arith.mulf %338, %339 : vector<1x8x128xf32>
    %cst_87 = arith.constant 2.000000e+00 : f32
    %341 = vector.broadcast %cst_87 : f32 to vector<1x8x128xf32>
    %342 = arith.subf %341, %340 : vector<1x8x128xf32>
    %343 = arith.mulf %339, %342 : vector<1x8x128xf32>
    %344 = arith.mulf %325, %343 : vector<1x8x128xf32>
    %345 = vector.broadcast %330 : vector<8x1x128xf32> to vector<8x8x128xf32>
    %346 = arith.mulf %333, %345 : vector<8x8x128xf32>
    %cst_88 = arith.constant dense<0.000000e+00> : vector<8x128xf32>
    %347 = vector.multi_reduction <add>, %346, %cst_88 [0] : vector<8x8x128xf32> to vector<8x128xf32>
    %348 = vector.shape_cast %347 : vector<8x128xf32> to vector<1x8x128xf32>
    %349 = arith.mulf %344, %348 : vector<1x8x128xf32>
    %cst_89 = arith.constant 9.99999971E-10 : f32
    %350 = vector.broadcast %cst_89 : f32 to vector<1x8x128xf32>
    %351 = arith.addf %349, %350 : vector<1x8x128xf32>
    %352 = tpu.reciprocal %351 {approx = true} : vector<1x8x128xf32> -> vector<1x8x128xf32>
    %353 = arith.mulf %351, %352 : vector<1x8x128xf32>
    %cst_90 = arith.constant 2.000000e+00 : f32
    %354 = vector.broadcast %cst_90 : f32 to vector<1x8x128xf32>
    %355 = arith.subf %354, %353 : vector<1x8x128xf32>
    %356 = arith.mulf %352, %355 : vector<1x8x128xf32>
    %357 = arith.mulf %325, %356 : vector<1x8x128xf32>
    %cst_91 = arith.constant 1.000000e+00 : f32
    %358 = vector.broadcast %cst_91 : f32 to vector<1x8x128xf32>
    %359 = arith.minimumf %357, %358 : vector<1x8x128xf32>
    %360 = arith.mulf %344, %359 : vector<1x8x128xf32>
    %361 = vector.broadcast %360 : vector<1x8x128xf32> to vector<8x8x128xf32>
    %362 = arith.mulf %346, %361 : vector<8x8x128xf32>
    %363 = arith.addf %321, %362 : vector<8x8x128xf32>
    %364 = arith.mulf %360, %348 : vector<1x8x128xf32>
    %365 = arith.subf %325, %364 : vector<1x8x128xf32>
    %cst_92 = arith.constant 0.000000e+00 : f32
    %366 = vector.broadcast %cst_92 : f32 to vector<1x8x128xf32>
    %367 = arith.maximumf %365, %366 : vector<1x8x128xf32>
    %cst_93 = arith.constant dense<0.000000e+00> : vector<8x128xf32>
    %368 = vector.multi_reduction <add>, %362, %cst_93 [1] : vector<8x8x128xf32> to vector<8x128xf32>
    %369 = vector.shape_cast %368 : vector<8x128xf32> to vector<8x1x128xf32>
    %370 = arith.subf %330, %369 : vector<8x1x128xf32>
    %cst_94 = arith.constant 0.000000e+00 : f32
    %371 = vector.broadcast %cst_94 : f32 to vector<8x1x128xf32>
    %372 = arith.maximumf %370, %371 : vector<8x1x128xf32>
    %cst_95 = arith.constant -2.500000e-01 : f32
    %373 = vector.broadcast %cst_95 : f32 to vector<8x8x128xf32>
    %374 = arith.mulf %373, %33 : vector<8x8x128xf32>
    %375 = math.exp %374 : vector<8x8x128xf32>
    %cst_96 = arith.constant dense<0.000000e+00> : vector<8x128xf32>
    %376 = vector.multi_reduction <add>, %375, %cst_96 [0] : vector<8x8x128xf32> to vector<8x128xf32>
    %377 = vector.shape_cast %376 : vector<8x128xf32> to vector<1x8x128xf32>
    %378 = arith.mulf %367, %377 : vector<1x8x128xf32>
    %cst_97 = arith.constant 9.99999971E-10 : f32
    %379 = vector.broadcast %cst_97 : f32 to vector<1x8x128xf32>
    %380 = arith.addf %378, %379 : vector<1x8x128xf32>
    %381 = tpu.reciprocal %380 {approx = true} : vector<1x8x128xf32> -> vector<1x8x128xf32>
    %382 = arith.mulf %380, %381 : vector<1x8x128xf32>
    %cst_98 = arith.constant 2.000000e+00 : f32
    %383 = vector.broadcast %cst_98 : f32 to vector<1x8x128xf32>
    %384 = arith.subf %383, %382 : vector<1x8x128xf32>
    %385 = arith.mulf %381, %384 : vector<1x8x128xf32>
    %386 = arith.mulf %367, %385 : vector<1x8x128xf32>
    %387 = vector.broadcast %372 : vector<8x1x128xf32> to vector<8x8x128xf32>
    %388 = arith.mulf %375, %387 : vector<8x8x128xf32>
    %cst_99 = arith.constant dense<0.000000e+00> : vector<8x128xf32>
    %389 = vector.multi_reduction <add>, %388, %cst_99 [0] : vector<8x8x128xf32> to vector<8x128xf32>
    %390 = vector.shape_cast %389 : vector<8x128xf32> to vector<1x8x128xf32>
    %391 = arith.mulf %386, %390 : vector<1x8x128xf32>
    %cst_100 = arith.constant 9.99999971E-10 : f32
    %392 = vector.broadcast %cst_100 : f32 to vector<1x8x128xf32>
    %393 = arith.addf %391, %392 : vector<1x8x128xf32>
    %394 = tpu.reciprocal %393 {approx = true} : vector<1x8x128xf32> -> vector<1x8x128xf32>
    %395 = arith.mulf %393, %394 : vector<1x8x128xf32>
    %cst_101 = arith.constant 2.000000e+00 : f32
    %396 = vector.broadcast %cst_101 : f32 to vector<1x8x128xf32>
    %397 = arith.subf %396, %395 : vector<1x8x128xf32>
    %398 = arith.mulf %394, %397 : vector<1x8x128xf32>
    %399 = arith.mulf %367, %398 : vector<1x8x128xf32>
    %cst_102 = arith.constant 1.000000e+00 : f32
    %400 = vector.broadcast %cst_102 : f32 to vector<1x8x128xf32>
    %401 = arith.minimumf %399, %400 : vector<1x8x128xf32>
    %402 = arith.mulf %386, %401 : vector<1x8x128xf32>
    %403 = vector.broadcast %402 : vector<1x8x128xf32> to vector<8x8x128xf32>
    %404 = arith.mulf %388, %403 : vector<8x8x128xf32>
    %405 = arith.addf %363, %404 : vector<8x8x128xf32>
    %406 = arith.mulf %402, %390 : vector<1x8x128xf32>
    %407 = arith.subf %367, %406 : vector<1x8x128xf32>
    %cst_103 = arith.constant 0.000000e+00 : f32
    %408 = vector.broadcast %cst_103 : f32 to vector<1x8x128xf32>
    %409 = arith.maximumf %407, %408 : vector<1x8x128xf32>
    %cst_104 = arith.constant dense<0.000000e+00> : vector<8x128xf32>
    %410 = vector.multi_reduction <add>, %404, %cst_104 [1] : vector<8x8x128xf32> to vector<8x128xf32>
    %411 = vector.shape_cast %410 : vector<8x128xf32> to vector<8x1x128xf32>
    %412 = arith.subf %372, %411 : vector<8x1x128xf32>
    %cst_105 = arith.constant 0.000000e+00 : f32
    %413 = vector.broadcast %cst_105 : f32 to vector<8x1x128xf32>
    %414 = arith.maximumf %412, %413 : vector<8x1x128xf32>
    %cst_106 = arith.constant 8.000000e+00 : f32
    %415 = vector.broadcast %cst_106 : f32 to vector<1x8x128xf32>
    %416 = arith.mulf %409, %415 : vector<1x8x128xf32>
    %cst_107 = arith.constant 9.99999971E-10 : f32
    %417 = vector.broadcast %cst_107 : f32 to vector<1x8x128xf32>
    %418 = arith.addf %416, %417 : vector<1x8x128xf32>
    %419 = tpu.reciprocal %418 {approx = true} : vector<1x8x128xf32> -> vector<1x8x128xf32>
    %420 = arith.mulf %418, %419 : vector<1x8x128xf32>
    %cst_108 = arith.constant 2.000000e+00 : f32
    %421 = vector.broadcast %cst_108 : f32 to vector<1x8x128xf32>
    %422 = arith.subf %421, %420 : vector<1x8x128xf32>
    %423 = arith.mulf %419, %422 : vector<1x8x128xf32>
    %424 = arith.mulf %409, %423 : vector<1x8x128xf32>
    %cst_109 = arith.constant dense<0.000000e+00> : vector<1x128xf32>
    %425 = vector.multi_reduction <add>, %414, %cst_109 [0] : vector<8x1x128xf32> to vector<1x128xf32>
    %426 = vector.shape_cast %425 : vector<1x128xf32> to vector<1x1x128xf32>
    %427 = vector.broadcast %426 : vector<1x1x128xf32> to vector<1x8x128xf32>
    %428 = arith.mulf %424, %427 : vector<1x8x128xf32>
    %cst_110 = arith.constant 9.99999971E-10 : f32
    %429 = vector.broadcast %cst_110 : f32 to vector<1x8x128xf32>
    %430 = arith.addf %428, %429 : vector<1x8x128xf32>
    %431 = tpu.reciprocal %430 {approx = true} : vector<1x8x128xf32> -> vector<1x8x128xf32>
    %432 = arith.mulf %430, %431 : vector<1x8x128xf32>
    %cst_111 = arith.constant 2.000000e+00 : f32
    %433 = vector.broadcast %cst_111 : f32 to vector<1x8x128xf32>
    %434 = arith.subf %433, %432 : vector<1x8x128xf32>
    %435 = arith.mulf %431, %434 : vector<1x8x128xf32>
    %436 = arith.mulf %409, %435 : vector<1x8x128xf32>
    %cst_112 = arith.constant 1.000000e+00 : f32
    %437 = vector.broadcast %cst_112 : f32 to vector<1x8x128xf32>
    %438 = arith.minimumf %436, %437 : vector<1x8x128xf32>
    %439 = arith.mulf %424, %438 : vector<1x8x128xf32>
    %440 = vector.broadcast %414 : vector<8x1x128xf32> to vector<8x8x128xf32>
    %441 = vector.broadcast %439 : vector<1x8x128xf32> to vector<8x8x128xf32>
    %442 = arith.mulf %440, %441 : vector<8x8x128xf32>
    %443 = arith.addf %405, %442 : vector<8x8x128xf32>
    %444 = arith.mulf %443, %33 : vector<8x8x128xf32>
    %cst_113 = arith.constant dense<0.000000e+00> : vector<128xf32>
    %445 = vector.multi_reduction <add>, %444, %cst_113 [0, 1] : vector<8x8x128xf32> to vector<128xf32>
    %446 = vector.shape_cast %445 : vector<128xf32> to vector<1x1x128xf32>
    %c0_114 = arith.constant 0 : index
    %c0_115 = arith.constant 0 : index
    %c0_116 = arith.constant 0 : index
    %447 = vector.load %arg3[%c0_114, %c0_115, %c0_116] : memref<1x1x128xf32, #tpu.memory_space<vmem>>, vector<1x1x128xf32>
    tpu.vector_store %arg3[%c0_114, %c0_115, %c0_116], %446 {strides = array<i32>} : memref<1x1x128xf32, #tpu.memory_space<vmem>>, vector<1x1x128xf32>,
    return
  }
  func.func @transform_0(%arg0: i32) -> (i32, i32, i32) {
    %c0_i32 = arith.constant 0 : i32
    %c0_i32_0 = arith.constant 0 : i32
    %c0_i32_1 = arith.constant 0 : i32
    return %c0_i32, %c0_i32_0, %arg0 : i32, i32, i32
  }
  func.func @transform_1(%arg0: i32) -> (i32, i32, i32) {
    %c0_i32 = arith.constant 0 : i32
    %c0_i32_0 = arith.constant 0 : i32
    %c0_i32_1 = arith.constant 0 : i32
    return %c0_i32, %c0_i32_0, %arg0 : i32, i32, i32
  }
  func.func @transform_2(%arg0: i32) -> (i32, i32, i32) {
    %c0_i32 = arith.constant 0 : i32
    %c0_i32_0 = arith.constant 0 : i32
    %c0_i32_1 = arith.constant 0 : i32
    return %arg0, %c0_i32, %c0_i32_0 : i32, i32, i32
  }
}

</mosaic_0001>

<llo_original>
// kernel: tpu_custom_call.1
$region0: #{tpu_custom_call.1}
  #allocation0 [shape = 'u32[]', space=smem, size = 0x4, offset = 0x4, fixed_abs, tag = 'smem constant byte address 0x4 - core index']
  #allocation1 [shape = 'u32[144,128]{1,0:T(1,128)}', space=vmem, size = 0x12000, scoped, tag = 'internal scratch']
  %s0 = inlined_call_operand.hbm [shape: f32[3,8,128], index: 0, kind: input, shape index: {}]
  %s1 = inlined_call_operand.hbm [shape: f32[3,8,128], index: 1, kind: input, shape index: {}]
  %s2 = inlined_call_operand.hbm [shape: f32[1,1,128], index: 2, kind: output, shape index: {}]
  %s3 = sld [smem:[#allocation0]]
  $region26: #{tpu_custom_call.1} parent=0
    _
  %s5 = ssub.s32 1, %s3
  %s6 = scalar_select 0, %s5, %s3
  $region1: #{tpu_custom_call.1} parent=0
    #allocation2 [shape = 'u8[12288]{0}', space=vmem, size = 0x3000, scoped, tag = 'input window, operand 0, single buffered']
    #allocation3 [shape = 's32[1]{0}', space=sflag, size = 0x4, scoped, tag = 'scoped memory for tpu_custom_call.1']
    #allocation4 [shape = 's32[1]{0}', space=sflag, size = 0x4, scoped, tag = 'scoped memory for tpu_custom_call.1']
    #allocation5 [shape = 'u8[12288]{0}', space=vmem, size = 0x3000, scoped, tag = 'input window, operand 1, single buffered']
    #allocation6 [shape = 's32[1]{0}', space=sflag, size = 0x4, scoped, tag = 'scoped memory for tpu_custom_call.1']
    #allocation7 [shape = 'u8[512]{0}', space=vmem, size = 0x400, scoped, tag = 'output window, operand 0, single buffered']
    %7 = vsyncpa [#allocation3], 0
    %8 = vsyncpa [#allocation6], 0
    %9 = vsyncpa [#allocation4], 0
    // Predicated region
    $region2: #{tpu_custom_call.1} parent=1 // pred_check
      _
    $region3: #{tpu_custom_call.1} parent=1 // pred_check_branch
      %11 = sbr.rel (0) target = $region5
    $region4: #{tpu_custom_call.1} parent=1 // pred_region
      %s13 = ssub.s32 384, 384
      %14 = vsyncadd [#allocation3], %s13
      %s15 = sshll.u32 [#allocation2], 4
      %s16 = int_to_ptr.vmem [resolvable:$true] %s15
      %21 = dma.hbm_to_vmem [thread:$0]  %s0, 384, %s16, [#allocation3], 128, 128, 8
    $region5: #{tpu_custom_call.1} parent=1 // pred_fallthru
      _
    // Predicated region
    $region6: #{tpu_custom_call.1} parent=1 // pred_check
      _
    $region7: #{tpu_custom_call.1} parent=1 // pred_check_branch
      %23 = sbr.rel (0) target = $region9
    $region8: #{tpu_custom_call.1} parent=1 // pred_region
      %s25 = ssub.s32 384, 384
      %26 = vsyncadd [#allocation6], %s25
      %s27 = sshll.u32 [#allocation5], 4
      %s28 = int_to_ptr.vmem [resolvable:$true] %s27
      %33 = dma.hbm_to_vmem [thread:$0]  %s1, 384, %s28, [#allocation6], 128, 128, 8
    $region9: #{tpu_custom_call.1} parent=1 // pred_fallthru
      _
    // Predicated region
    $region10: #{tpu_custom_call.1} parent=1 // pred_check
      _
    $region11: #{tpu_custom_call.1} parent=1 // pred_check_branch
      %35 = sbr.rel (0) target = $region13
    $region12: #{tpu_custom_call.1} parent=1 // pred_region
      %36 = dma.done [#allocation3], 384
    $region13: #{tpu_custom_call.1} parent=1 // pred_fallthru
      _
    // Predicated region
    $region14: #{tpu_custom_call.1} parent=1 // pred_check
      _
    $region15: #{tpu_custom_call.1} parent=1 // pred_check_branch
      %38 = sbr.rel (0) target = $region17
    $region16: #{tpu_custom_call.1} parent=1 // pred_region
      %39 = dma.done [#allocation6], 384
    $region17: #{tpu_custom_call.1} parent=1 // pred_fallthru
      _
    %v40 = vld [vmem:[#allocation2] sm:$0xff]
    %v41 = vld [vmem:[#allocation2 + $0x8] sm:$0xff]
    %v42 = vld [vmem:[#allocation2 + $0x10] sm:$0xff]
    %v43 = vld [vmem:[#allocation5] sm:$0xff]
    %v44 = vld [vmem:[#allocation5 + $0x8] sm:$0xff]
    %v45 = vld [vmem:[#allocation5 + $0x10] sm:$0xff]
    %v47 = vcombine.high %v40, %v40
    %v49 = vunpack.c.l.s4 1966171168
    %v50 = vunpack.c.0.s8 %v49
    %v51 = vlaneseq
    %v52 = vshrl.u32 %v51, 7
    %v53 = vsub.s32 %v50, %v52
    %v54 = vrot.slane %v40, %v53
    %v56 = vunpack.c.l.s4 1966171168
    %v57 = vunpack.c.0.s8 %v56
    %v58 = vlaneseq
    %v59 = vshrl.u32 %v58, 7
    %v60 = vsub.s32 %v57, %v59
    %v61 = vrot.slane %v47, %v60
    %v62 = vcombine.high %v54, %v54
    %v63 = vcombine.high %v61, %v61
    %v65 = vunpack.c.l.s4 1966171168
    %v66 = vunpack.c.0.s8 %v65
    %v67 = vlaneseq
    %v68 = vshrl.u32 %v67, 7
    %v69 = vsub.s32 %v66, %v68
    %v70 = vrot.slane %v54, %v69
    %v72 = vunpack.c.l.s4 1966171168
    %v73 = vunpack.c.0.s8 %v72
    %v74 = vlaneseq
    %v75 = vshrl.u32 %v74, 7
    %v76 = vsub.s32 %v73, %v75
    %v77 = vrot.slane %v61, %v76
    %v79 = vunpack.c.l.s4 1966171168
    %v80 = vunpack.c.0.s8 %v79
    %v81 = vlaneseq
    %v82 = vshrl.u32 %v81, 7
    %v83 = vsub.s32 %v80, %v82
    %v84 = vrot.slane %v62, %v83
    %v86 = vunpack.c.l.s4 1966171168
    %v87 = vunpack.c.0.s8 %v86
    %v88 = vlaneseq
    %v89 = vshrl.u32 %v88, 7
    %v90 = vsub.s32 %v87, %v89
    %v91 = vrot.slane %v63, %v90
    %v92 = vcombine.high %v70, %v70
    %v93 = vcombine.high %v77, %v77
    %v94 = vcombine.high %v84, %v84
    %v95 = vcombine.high %v91, %v91
    %v96 = vlaneseq
    %v97 = vshrl.u32 %v96, 7
    %v98 = vsub.s32 0, %v97
    %v99 = vrot.slane %v70, %v98
    %v100 = vlaneseq
    %v101 = vshrl.u32 %v100, 7
    %v102 = vsub.s32 0, %v101
    %v103 = vrot.slane %v84, %v102
    %v104 = vlaneseq
    %v105 = vshrl.u32 %v104, 7
    %v106 = vsub.s32 0, %v105
    %v107 = vrot.slane %v92, %v106
    %v108 = vlaneseq
    %v109 = vshrl.u32 %v108, 7
    %v110 = vsub.s32 0, %v109
    %v111 = vrot.slane %v94, %v110
    %v112 = vlaneseq
    %v113 = vshrl.u32 %v112, 7
    %v114 = vsub.s32 0, %v113
    %v115 = vrot.slane %v77, %v114
    %v116 = vlaneseq
    %v117 = vshrl.u32 %v116, 7
    %v118 = vsub.s32 0, %v117
    %v119 = vrot.slane %v91, %v118
    %v120 = vlaneseq
    %v121 = vshrl.u32 %v120, 7
    %v122 = vsub.s32 0, %v121
    %v123 = vrot.slane %v93, %v122
    %v124 = vlaneseq
    %v125 = vshrl.u32 %v124, 7
    %v126 = vsub.s32 0, %v125
    %v127 = vrot.slane %v95, %v126
    %v136 = vsub.f32 %v99, %v43
    %v137 = vsub.f32 %v103, %v43
    %v138 = vsub.f32 %v107, %v43
    %v139 = vsub.f32 %v111, %v43
    %v140 = vsub.f32 %v115, %v43
    %v141 = vsub.f32 %v119, %v43
    %v142 = vsub.f32 %v123, %v43
    %v143 = vsub.f32 %v127, %v43
    %v144 = vmul.f32 %v136, %v136
    %v145 = vmul.f32 %v137, %v137
    %v146 = vmul.f32 %v138, %v138
    %v147 = vmul.f32 %v139, %v139
    %v148 = vmul.f32 %v140, %v140
    %v149 = vmul.f32 %v141, %v141
    %v150 = vmul.f32 %v142, %v142
    %v151 = vmul.f32 %v143, %v143
    %v153 = vcombine.high %v41, %v41
    %v155 = vunpack.c.l.s4 1966171168
    %v156 = vunpack.c.0.s8 %v155
    %v157 = vlaneseq
    %v158 = vshrl.u32 %v157, 7
    %v159 = vsub.s32 %v156, %v158
    %v160 = vrot.slane %v41, %v159
    %v162 = vunpack.c.l.s4 1966171168
    %v163 = vunpack.c.0.s8 %v162
    %v164 = vlaneseq
    %v165 = vshrl.u32 %v164, 7
    %v166 = vsub.s32 %v163, %v165
    %v167 = vrot.slane %v153, %v166
    %v168 = vcombine.high %v160, %v160
    %v169 = vcombine.high %v167, %v167
    %v171 = vunpack.c.l.s4 1966171168
    %v172 = vunpack.c.0.s8 %v171
    %v173 = vlaneseq
    %v174 = vshrl.u32 %v173, 7
    %v175 = vsub.s32 %v172, %v174
    %v176 = vrot.slane %v160, %v175
    %v178 = vunpack.c.l.s4 1966171168
    %v179 = vunpack.c.0.s8 %v178
    %v180 = vlaneseq
    %v181 = vshrl.u32 %v180, 7
    %v182 = vsub.s32 %v179, %v181
    %v183 = vrot.slane %v167, %v182
    %v185 = vunpack.c.l.s4 1966171168
    %v186 = vunpack.c.0.s8 %v185
    %v187 = vlaneseq
    %v188 = vshrl.u32 %v187, 7
    %v189 = vsub.s32 %v186, %v188
    %v190 = vrot.slane %v168, %v189
    %v192 = vunpack.c.l.s4 1966171168
    %v193 = vunpack.c.0.s8 %v192
    %v194 = vlaneseq
    %v195 = vshrl.u32 %v194, 7
    %v196 = vsub.s32 %v193, %v195
    %v197 = vrot.slane %v169, %v196
    %v198 = vcombine.high %v176, %v176
    %v199 = vcombine.high %v183, %v183
    %v200 = vcombine.high %v190, %v190
    %v201 = vcombine.high %v197, %v197
    %v202 = vlaneseq
    %v203 = vshrl.u32 %v202, 7
    %v204 = vsub.s32 0, %v203
    %v205 = vrot.slane %v176, %v204
    %v206 = vlaneseq
    %v207 = vshrl.u32 %v206, 7
    %v208 = vsub.s32 0, %v207
    %v209 = vrot.slane %v190, %v208
    %v210 = vlaneseq
    %v211 = vshrl.u32 %v210, 7
    %v212 = vsub.s32 0, %v211
    %v213 = vrot.slane %v198, %v212
    %v214 = vlaneseq
    %v215 = vshrl.u32 %v214, 7
    %v216 = vsub.s32 0, %v215
    %v217 = vrot.slane %v200, %v216
    %v218 = vlaneseq
    %v219 = vshrl.u32 %v218, 7
    %v220 = vsub.s32 0, %v219
    %v221 = vrot.slane %v183, %v220
    %v222 = vlaneseq
    %v223 = vshrl.u32 %v222, 7
    %v224 = vsub.s32 0, %v223
    %v225 = vrot.slane %v197, %v224
    %v226 = vlaneseq
    %v227 = vshrl.u32 %v226, 7
    %v228 = vsub.s32 0, %v227
    %v229 = vrot.slane %v199, %v228
    %v230 = vlaneseq
    %v231 = vshrl.u32 %v230, 7
    %v232 = vsub.s32 0, %v231
    %v233 = vrot.slane %v201, %v232
    %v242 = vsub.f32 %v205, %v44
    %v243 = vsub.f32 %v209, %v44
    %v244 = vsub.f32 %v213, %v44
    %v245 = vsub.f32 %v217, %v44
    %v246 = vsub.f32 %v221, %v44
    %v247 = vsub.f32 %v225, %v44
    %v248 = vsub.f32 %v229, %v44
    %v249 = vsub.f32 %v233, %v44
    %v250 = vmul.f32 %v242, %v242
    %v251 = vmul.f32 %v243, %v243
    %v252 = vmul.f32 %v244, %v244
    %v253 = vmul.f32 %v245, %v245
    %v254 = vmul.f32 %v246, %v246
    %v255 = vmul.f32 %v247, %v247
    %v256 = vmul.f32 %v248, %v248
    %v257 = vmul.f32 %v249, %v249
    %v258 = vadd.f32 %v144, %v250
    %v259 = vadd.f32 %v145, %v251
    %v260 = vadd.f32 %v146, %v252
    %v261 = vadd.f32 %v147, %v253
    %v262 = vadd.f32 %v148, %v254
    %v263 = vadd.f32 %v149, %v255
    %v264 = vadd.f32 %v150, %v256
    %v265 = vadd.f32 %v151, %v257
    %v267 = vcombine.high %v42, %v42
    %v269 = vunpack.c.l.s4 1966171168
    %v270 = vunpack.c.0.s8 %v269
    %v271 = vlaneseq
    %v272 = vshrl.u32 %v271, 7
    %v273 = vsub.s32 %v270, %v272
    %v274 = vrot.slane %v42, %v273
    %v276 = vunpack.c.l.s4 1966171168
    %v277 = vunpack.c.0.s8 %v276
    %v278 = vlaneseq
    %v279 = vshrl.u32 %v278, 7
    %v280 = vsub.s32 %v277, %v279
    %v281 = vrot.slane %v267, %v280
    %v282 = vcombine.high %v274, %v274
    %v283 = vcombine.high %v281, %v281
    %v285 = vunpack.c.l.s4 1966171168
    %v286 = vunpack.c.0.s8 %v285
    %v287 = vlaneseq
    %v288 = vshrl.u32 %v287, 7
    %v289 = vsub.s32 %v286, %v288
    %v290 = vrot.slane %v274, %v289
    %v292 = vunpack.c.l.s4 1966171168
    %v293 = vunpack.c.0.s8 %v292
    %v294 = vlaneseq
    %v295 = vshrl.u32 %v294, 7
    %v296 = vsub.s32 %v293, %v295
    %v297 = vrot.slane %v281, %v296
    %v299 = vunpack.c.l.s4 1966171168
    %v300 = vunpack.c.0.s8 %v299
    %v301 = vlaneseq
    %v302 = vshrl.u32 %v301, 7
    %v303 = vsub.s32 %v300, %v302
    %v304 = vrot.slane %v282, %v303
    %v306 = vunpack.c.l.s4 1966171168
    %v307 = vunpack.c.0.s8 %v306
    %v308 = vlaneseq
    %v309 = vshrl.u32 %v308, 7
    %v310 = vsub.s32 %v307, %v309
    %v311 = vrot.slane %v283, %v310
    %v312 = vcombine.high %v290, %v290
    %v313 = vcombine.high %v297, %v297
    %v314 = vcombine.high %v304, %v304
    %v315 = vcombine.high %v311, %v311
    %v316 = vlaneseq
    %v317 = vshrl.u32 %v316, 7
    %v318 = vsub.s32 0, %v317
    %v319 = vrot.slane %v290, %v318
    %v320 = vlaneseq
    %v321 = vshrl.u32 %v320, 7
    %v322 = vsub.s32 0, %v321
    %v323 = vrot.slane %v304, %v322
    %v324 = vlaneseq
    %v325 = vshrl.u32 %v324, 7
    %v326 = vsub.s32 0, %v325
    %v327 = vrot.slane %v312, %v326
    %v328 = vlaneseq
    %v329 = vshrl.u32 %v328, 7
    %v330 = vsub.s32 0, %v329
    %v331 = vrot.slane %v314, %v330
    %v332 = vlaneseq
    %v333 = vshrl.u32 %v332, 7
    %v334 = vsub.s32 0, %v333
    %v335 = vrot.slane %v297, %v334
    %v336 = vlaneseq
    %v337 = vshrl.u32 %v336, 7
    %v338 = vsub.s32 0, %v337
    %v339 = vrot.slane %v311, %v338
    %v340 = vlaneseq
    %v341 = vshrl.u32 %v340, 7
    %v342 = vsub.s32 0, %v341
    %v343 = vrot.slane %v313, %v342
    %v344 = vlaneseq
    %v345 = vshrl.u32 %v344, 7
    %v346 = vsub.s32 0, %v345
    %v347 = vrot.slane %v315, %v346
    %v356 = vsub.f32 %v319, %v45
    %v357 = vsub.f32 %v323, %v45
    %v358 = vsub.f32 %v327, %v45
    %v359 = vsub.f32 %v331, %v45
    %v360 = vsub.f32 %v335, %v45
    %v361 = vsub.f32 %v339, %v45
    %v362 = vsub.f32 %v343, %v45
    %v363 = vsub.f32 %v347, %v45
    %v364 = vmul.f32 %v356, %v356
    %v365 = vmul.f32 %v357, %v357
    %v366 = vmul.f32 %v358, %v358
    %v367 = vmul.f32 %v359, %v359
    %v368 = vmul.f32 %v360, %v360
    %v369 = vmul.f32 %v361, %v361
    %v370 = vmul.f32 %v362, %v362
    %v371 = vmul.f32 %v363, %v363
    %v372 = vadd.f32 %v258, %v364
    %v373 = vadd.f32 %v259, %v365
    %v374 = vadd.f32 %v260, %v366
    %v375 = vadd.f32 %v261, %v367
    %v376 = vadd.f32 %v262, %v368
    %v377 = vadd.f32 %v263, %v369
    %v378 = vadd.f32 %v264, %v370
    %v379 = vadd.f32 %v265, %v371
    %v380 = vmul.f32 %v372, -16384.0
    %v381 = vmul.f32 %v373, -16384.0
    %v382 = vmul.f32 %v374, -16384.0
    %v383 = vmul.f32 %v375, -16384.0
    %v384 = vmul.f32 %v376, -16384.0
    %v385 = vmul.f32 %v377, -16384.0
    %v386 = vmul.f32 %v378, -16384.0
    %v387 = vmul.f32 %v379, -16384.0
    %v388 = vmul.f32 %v380, 1.442695
    %v389 = vpow.pop %v388
    %v390 = vmul.f32 %v381, 1.442695
    %v391 = vpow.pop %v390
    %v392 = vmul.f32 %v382, 1.442695
    %v393 = vpow.pop %v392
    %v394 = vmul.f32 %v383, 1.442695
    %v395 = vpow.pop %v394
    %v396 = vmul.f32 %v384, 1.442695
    %v397 = vpow.pop %v396
    %v398 = vmul.f32 %v385, 1.442695
    %v399 = vpow.pop %v398
    %v400 = vmul.f32 %v386, 1.442695
    %v401 = vpow.pop %v400
    %v402 = vmul.f32 %v387, 1.442695
    %v403 = vpow.pop %v402
    %v404 = vadd.f32 %v389, %v391
    %v405 = vadd.f32 %v404, %v393
    %v406 = vadd.f32 %v405, %v395
    %v407 = vadd.f32 %v406, %v397
    %v408 = vadd.f32 %v407, %v399
    %v409 = vadd.f32 %v408, %v401
    %v410 = vadd.f32 %v409, %v403
    %v411 = vadd.f32 %v410, 1e-09
    %v412 = vrcp.pop %v411
    %v413 = vmul.f32 %v411, %v412
    %v414 = vsub.f32 2.0, %v413
    %v415 = vmul.f32 %v412, %v414
    %v416 = vmul.f32 %v415, %v410
    %v417 = vadd.f32 %v416, 1e-09
    %v418 = vrcp.pop %v417
    %v419 = vmul.f32 %v417, %v418
    %v420 = vsub.f32 2.0, %v419
    %v421 = vmul.f32 %v418, %v420
    %v422 = vmin.f32 %v421, 1.0
    %v423 = vmul.f32 %v415, %v422
    %v424 = vmul.f32 %v389, %v423
    %v425 = vmul.f32 %v391, %v423
    %v426 = vmul.f32 %v393, %v423
    %v427 = vmul.f32 %v395, %v423
    %v428 = vmul.f32 %v397, %v423
    %v429 = vmul.f32 %v399, %v423
    %v430 = vmul.f32 %v401, %v423
    %v431 = vmul.f32 %v403, %v423
    %v432 = vadd.f32 %v424, 0.0
    %v433 = vadd.f32 %v425, 0.0
    %v434 = vadd.f32 %v426, 0.0
    %v435 = vadd.f32 %v427, 0.0
    %v436 = vadd.f32 %v428, 0.0
    %v437 = vadd.f32 %v429, 0.0
    %v438 = vadd.f32 %v430, 0.0
    %v439 = vadd.f32 %v431, 0.0
    %v440 = vmul.f32 %v423, %v410
    %v441 = vsub.f32 1.0, %v440
    %v442 = vmax.f32 %v441, 0.0
    %v443 = vrot.slane %v424, 4
    %v444 = vadd.f32 %v424, %v443
    %v445 = vrot.slane %v444, 2
    %v446 = vadd.f32 %v444, %v445
    %v447 = vrot.slane %v446, 1
    %v448 = vadd.f32 %v446, %v447
    %v449 = vrot.slane %v425, 4
    %v450 = vadd.f32 %v425, %v449
    %v451 = vrot.slane %v450, 2
    %v452 = vadd.f32 %v450, %v451
    %v453 = vrot.slane %v452, 1
    %v454 = vadd.f32 %v452, %v453
    %v455 = vrot.slane %v426, 4
    %v456 = vadd.f32 %v426, %v455
    %v457 = vrot.slane %v456, 2
    %v458 = vadd.f32 %v456, %v457
    %v459 = vrot.slane %v458, 1
    %v460 = vadd.f32 %v458, %v459
    %v461 = vrot.slane %v427, 4
    %v462 = vadd.f32 %v427, %v461
    %v463 = vrot.slane %v462, 2
    %v464 = vadd.f32 %v462, %v463
    %v465 = vrot.slane %v464, 1
    %v466 = vadd.f32 %v464, %v465
    %v467 = vrot.slane %v428, 4
    %v468 = vadd.f32 %v428, %v467
    %v469 = vrot.slane %v468, 2
    %v470 = vadd.f32 %v468, %v469
    %v471 = vrot.slane %v470, 1
    %v472 = vadd.f32 %v470, %v471
    %v473 = vrot.slane %v429, 4
    %v474 = vadd.f32 %v429, %v473
    %v475 = vrot.slane %v474, 2
    %v476 = vadd.f32 %v474, %v475
    %v477 = vrot.slane %v476, 1
    %v478 = vadd.f32 %v476, %v477
    %v479 = vrot.slane %v430, 4
    %v480 = vadd.f32 %v430, %v479
    %v481 = vrot.slane %v480, 2
    %v482 = vadd.f32 %v480, %v481
    %v483 = vrot.slane %v482, 1
    %v484 = vadd.f32 %v482, %v483
    %v485 = vrot.slane %v431, 4
    %v486 = vadd.f32 %v431, %v485
    %v487 = vrot.slane %v486, 2
    %v488 = vadd.f32 %v486, %v487
    %v489 = vrot.slane %v488, 1
    %v490 = vadd.f32 %v488, %v489
    %v491 = vsub.f32 1.0, %v448
    %v492 = vsub.f32 1.0, %v454
    %v493 = vsub.f32 1.0, %v460
    %v494 = vsub.f32 1.0, %v466
    %v495 = vsub.f32 1.0, %v472
    %v496 = vsub.f32 1.0, %v478
    %v497 = vsub.f32 1.0, %v484
    %v498 = vsub.f32 1.0, %v490
    %v499 = vmax.f32 %v491, 0.0
    %v500 = vmax.f32 %v492, 0.0
    %v501 = vmax.f32 %v493, 0.0
    %v502 = vmax.f32 %v494, 0.0
    %v503 = vmax.f32 %v495, 0.0
    %v504 = vmax.f32 %v496, 0.0
    %v505 = vmax.f32 %v497, 0.0
    %v506 = vmax.f32 %v498, 0.0
    %v507 = vmul.f32 %v372, -4096.0
    %v508 = vmul.f32 %v373, -4096.0
    %v509 = vmul.f32 %v374, -4096.0
    %v510 = vmul.f32 %v375, -4096.0
    %v511 = vmul.f32 %v376, -4096.0
    %v512 = vmul.f32 %v377, -4096.0
    %v513 = vmul.f32 %v378, -4096.0
    %v514 = vmul.f32 %v379, -4096.0
    %v515 = vmul.f32 %v507, 1.442695
    %v516 = vpow.pop %v515
    %v517 = vmul.f32 %v508, 1.442695
    %v518 = vpow.pop %v517
    %v519 = vmul.f32 %v509, 1.442695
    %v520 = vpow.pop %v519
    %v521 = vmul.f32 %v510, 1.442695
    %v522 = vpow.pop %v521
    %v523 = vmul.f32 %v511, 1.442695
    %v524 = vpow.pop %v523
    %v525 = vmul.f32 %v512, 1.442695
    %v526 = vpow.pop %v525
    %v527 = vmul.f32 %v513, 1.442695
    %v528 = vpow.pop %v527
    %v529 = vmul.f32 %v514, 1.442695
    %v530 = vpow.pop %v529
    %v531 = vadd.f32 %v516, %v518
    %v532 = vadd.f32 %v531, %v520
    %v533 = vadd.f32 %v532, %v522
    %v534 = vadd.f32 %v533, %v524
    %v535 = vadd.f32 %v534, %v526
    %v536 = vadd.f32 %v535, %v528
    %v537 = vadd.f32 %v536, %v530
    %v538 = vmul.f32 %v442, %v537
    %v539 = vadd.f32 %v538, 1e-09
    %v540 = vrcp.pop %v539
    %v541 = vmul.f32 %v539, %v540
    %v542 = vsub.f32 2.0, %v541
    %v543 = vmul.f32 %v540, %v542
    %v544 = vmul.f32 %v442, %v543
    %v545 = vmul.f32 %v516, %v499
    %v546 = vmul.f32 %v518, %v500
    %v547 = vmul.f32 %v520, %v501
    %v548 = vmul.f32 %v522, %v502
    %v549 = vmul.f32 %v524, %v503
    %v550 = vmul.f32 %v526, %v504
    %v551 = vmul.f32 %v528, %v505
    %v552 = vmul.f32 %v530, %v506
    %v553 = vadd.f32 %v545, %v546
    %v554 = vadd.f32 %v553, %v547
    %v555 = vadd.f32 %v554, %v548
    %v556 = vadd.f32 %v555, %v549
    %v557 = vadd.f32 %v556, %v550
    %v558 = vadd.f32 %v557, %v551
    %v559 = vadd.f32 %v558, %v552
    %v560 = vmul.f32 %v544, %v559
    %v561 = vadd.f32 %v560, 1e-09
    %v562 = vrcp.pop %v561
    %v563 = vmul.f32 %v561, %v562
    %v564 = vsub.f32 2.0, %v563
    %v565 = vmul.f32 %v562, %v564
    %v566 = vmul.f32 %v442, %v565
    %v567 = vmin.f32 %v566, 1.0
    %v568 = vmul.f32 %v544, %v567
    %v569 = vmul.f32 %v545, %v568
    %v570 = vmul.f32 %v546, %v568
    %v571 = vmul.f32 %v547, %v568
    %v572 = vmul.f32 %v548, %v568
    %v573 = vmul.f32 %v549, %v568
    %v574 = vmul.f32 %v550, %v568
    %v575 = vmul.f32 %v551, %v568
    %v576 = vmul.f32 %v552, %v568
    %v577 = vadd.f32 %v432, %v569
    %v578 = vadd.f32 %v433, %v570
    %v579 = vadd.f32 %v434, %v571
    %v580 = vadd.f32 %v435, %v572
    %v581 = vadd.f32 %v436, %v573
    %v582 = vadd.f32 %v437, %v574
    %v583 = vadd.f32 %v438, %v575
    %v584 = vadd.f32 %v439, %v576
    %v585 = vmul.f32 %v568, %v559
    %v586 = vsub.f32 %v442, %v585
    %v587 = vmax.f32 %v586, 0.0
    %v588 = vrot.slane %v569, 4
    %v589 = vadd.f32 %v569, %v588
    %v590 = vrot.slane %v589, 2
    %v591 = vadd.f32 %v589, %v590
    %v592 = vrot.slane %v591, 1
    %v593 = vadd.f32 %v591, %v592
    %v594 = vrot.slane %v570, 4
    %v595 = vadd.f32 %v570, %v594
    %v596 = vrot.slane %v595, 2
    %v597 = vadd.f32 %v595, %v596
    %v598 = vrot.slane %v597, 1
    %v599 = vadd.f32 %v597, %v598
    %v600 = vrot.slane %v571, 4
    %v601 = vadd.f32 %v571, %v600
    %v602 = vrot.slane %v601, 2
    %v603 = vadd.f32 %v601, %v602
    %v604 = vrot.slane %v603, 1
    %v605 = vadd.f32 %v603, %v604
    %v606 = vrot.slane %v572, 4
    %v607 = vadd.f32 %v572, %v606
    %v608 = vrot.slane %v607, 2
    %v609 = vadd.f32 %v607, %v608
    %v610 = vrot.slane %v609, 1
    %v611 = vadd.f32 %v609, %v610
    %v612 = vrot.slane %v573, 4
    %v613 = vadd.f32 %v573, %v612
    %v614 = vrot.slane %v613, 2
    %v615 = vadd.f32 %v613, %v614
    %v616 = vrot.slane %v615, 1
    %v617 = vadd.f32 %v615, %v616
    %v618 = vrot.slane %v574, 4
    %v619 = vadd.f32 %v574, %v618
    %v620 = vrot.slane %v619, 2
    %v621 = vadd.f32 %v619, %v620
    %v622 = vrot.slane %v621, 1
    %v623 = vadd.f32 %v621, %v622
    %v624 = vrot.slane %v575, 4
    %v625 = vadd.f32 %v575, %v624
    %v626 = vrot.slane %v625, 2
    %v627 = vadd.f32 %v625, %v626
    %v628 = vrot.slane %v627, 1
    %v629 = vadd.f32 %v627, %v628
    %v630 = vrot.slane %v576, 4
    %v631 = vadd.f32 %v576, %v630
    %v632 = vrot.slane %v631, 2
    %v633 = vadd.f32 %v631, %v632
    %v634 = vrot.slane %v633, 1
    %v635 = vadd.f32 %v633, %v634
    %v636 = vsub.f32 %v499, %v593
    %v637 = vsub.f32 %v500, %v599
    %v638 = vsub.f32 %v501, %v605
    %v639 = vsub.f32 %v502, %v611
    %v640 = vsub.f32 %v503, %v617
    %v641 = vsub.f32 %v504, %v623
    %v642 = vsub.f32 %v505, %v629
    %v643 = vsub.f32 %v506, %v635
    %v644 = vmax.f32 %v636, 0.0
    %v645 = vmax.f32 %v637, 0.0
    %v646 = vmax.f32 %v638, 0.0
    %v647 = vmax.f32 %v639, 0.0
    %v648 = vmax.f32 %v640, 0.0
    %v649 = vmax.f32 %v641, 0.0
    %v650 = vmax.f32 %v642, 0.0
    %v651 = vmax.f32 %v643, 0.0
    %v652 = vmul.f32 %v372, -1024.0
    %v653 = vmul.f32 %v373, -1024.0
    %v654 = vmul.f32 %v374, -1024.0
    %v655 = vmul.f32 %v375, -1024.0
    %v656 = vmul.f32 %v376, -1024.0
    %v657 = vmul.f32 %v377, -1024.0
    %v658 = vmul.f32 %v378, -1024.0
    %v659 = vmul.f32 %v379, -1024.0
    %v660 = vmul.f32 %v652, 1.442695
    %v661 = vpow.pop %v660
    %v662 = vmul.f32 %v653, 1.442695
    %v663 = vpow.pop %v662
    %v664 = vmul.f32 %v654, 1.442695
    %v665 = vpow.pop %v664
    %v666 = vmul.f32 %v655, 1.442695
    %v667 = vpow.pop %v666
    %v668 = vmul.f32 %v656, 1.442695
    %v669 = vpow.pop %v668
    %v670 = vmul.f32 %v657, 1.442695
    %v671 = vpow.pop %v670
    %v672 = vmul.f32 %v658, 1.442695
    %v673 = vpow.pop %v672
    %v674 = vmul.f32 %v659, 1.442695
    %v675 = vpow.pop %v674
    %v676 = vadd.f32 %v661, %v663
    %v677 = vadd.f32 %v676, %v665
    %v678 = vadd.f32 %v677, %v667
    %v679 = vadd.f32 %v678, %v669
    %v680 = vadd.f32 %v679, %v671
    %v681 = vadd.f32 %v680, %v673
    %v682 = vadd.f32 %v681, %v675
    %v683 = vmul.f32 %v587, %v682
    %v684 = vadd.f32 %v683, 1e-09
    %v685 = vrcp.pop %v684
    %v686 = vmul.f32 %v684, %v685
    %v687 = vsub.f32 2.0, %v686
    %v688 = vmul.f32 %v685, %v687
    %v689 = vmul.f32 %v587, %v688
    %v690 = vmul.f32 %v661, %v644
    %v691 = vmul.f32 %v663, %v645
    %v692 = vmul.f32 %v665, %v646
    %v693 = vmul.f32 %v667, %v647
    %v694 = vmul.f32 %v669, %v648
    %v695 = vmul.f32 %v671, %v649
    %v696 = vmul.f32 %v673, %v650
    %v697 = vmul.f32 %v675, %v651
    %v698 = vadd.f32 %v690, %v691
    %v699 = vadd.f32 %v698, %v692
    %v700 = vadd.f32 %v699, %v693
    %v701 = vadd.f32 %v700, %v694
    %v702 = vadd.f32 %v701, %v695
    %v703 = vadd.f32 %v702, %v696
    %v704 = vadd.f32 %v703, %v697
    %v705 = vmul.f32 %v689, %v704
    %v706 = vadd.f32 %v705, 1e-09
    %v707 = vrcp.pop %v706
    %v708 = vmul.f32 %v706, %v707
    %v709 = vsub.f32 2.0, %v708
    %v710 = vmul.f32 %v707, %v709
    %v711 = vmul.f32 %v587, %v710
    %v712 = vmin.f32 %v711, 1.0
    %v713 = vmul.f32 %v689, %v712
    %v714 = vmul.f32 %v690, %v713
    %v715 = vmul.f32 %v691, %v713
    %v716 = vmul.f32 %v692, %v713
    %v717 = vmul.f32 %v693, %v713
    %v718 = vmul.f32 %v694, %v713
    %v719 = vmul.f32 %v695, %v713
    %v720 = vmul.f32 %v696, %v713
    %v721 = vmul.f32 %v697, %v713
    %v722 = vadd.f32 %v577, %v714
    %v723 = vadd.f32 %v578, %v715
    %v724 = vadd.f32 %v579, %v716
    %v725 = vadd.f32 %v580, %v717
    %v726 = vadd.f32 %v581, %v718
    %v727 = vadd.f32 %v582, %v719
    %v728 = vadd.f32 %v583, %v720
    %v729 = vadd.f32 %v584, %v721
    %v730 = vmul.f32 %v713, %v704
    %v731 = vsub.f32 %v587, %v730
    %v732 = vmax.f32 %v731, 0.0
    %v733 = vrot.slane %v714, 4
    %v734 = vadd.f32 %v714, %v733
    %v735 = vrot.slane %v734, 2
    %v736 = vadd.f32 %v734, %v735
    %v737 = vrot.slane %v736, 1
    %v738 = vadd.f32 %v736, %v737
    %v739 = vrot.slane %v715, 4
    %v740 = vadd.f32 %v715, %v739
    %v741 = vrot.slane %v740, 2
    %v742 = vadd.f32 %v740, %v741
    %v743 = vrot.slane %v742, 1
    %v744 = vadd.f32 %v742, %v743
    %v745 = vrot.slane %v716, 4
    %v746 = vadd.f32 %v716, %v745
    %v747 = vrot.slane %v746, 2
    %v748 = vadd.f32 %v746, %v747
    %v749 = vrot.slane %v748, 1
    %v750 = vadd.f32 %v748, %v749
    %v751 = vrot.slane %v717, 4
    %v752 = vadd.f32 %v717, %v751
    %v753 = vrot.slane %v752, 2
    %v754 = vadd.f32 %v752, %v753
    %v755 = vrot.slane %v754, 1
    %v756 = vadd.f32 %v754, %v755
    %v757 = vrot.slane %v718, 4
    %v758 = vadd.f32 %v718, %v757
    %v759 = vrot.slane %v758, 2
    %v760 = vadd.f32 %v758, %v759
    %v761 = vrot.slane %v760, 1
    %v762 = vadd.f32 %v760, %v761
    %v763 = vrot.slane %v719, 4
    %v764 = vadd.f32 %v719, %v763
    %v765 = vrot.slane %v764, 2
    %v766 = vadd.f32 %v764, %v765
    %v767 = vrot.slane %v766, 1
    %v768 = vadd.f32 %v766, %v767
    %v769 = vrot.slane %v720, 4
    %v770 = vadd.f32 %v720, %v769
    %v771 = vrot.slane %v770, 2
    %v772 = vadd.f32 %v770, %v771
    %v773 = vrot.slane %v772, 1
    %v774 = vadd.f32 %v772, %v773
    %v775 = vrot.slane %v721, 4
    %v776 = vadd.f32 %v721, %v775
    %v777 = vrot.slane %v776, 2
    %v778 = vadd.f32 %v776, %v777
    %v779 = vrot.slane %v778, 1
    %v780 = vadd.f32 %v778, %v779
    %v781 = vsub.f32 %v644, %v738
    %v782 = vsub.f32 %v645, %v744
    %v783 = vsub.f32 %v646, %v750
    %v784 = vsub.f32 %v647, %v756
    %v785 = vsub.f32 %v648, %v762
    %v786 = vsub.f32 %v649, %v768
    %v787 = vsub.f32 %v650, %v774
    %v788 = vsub.f32 %v651, %v780
    %v789 = vmax.f32 %v781, 0.0
    %v790 = vmax.f32 %v782, 0.0
    %v791 = vmax.f32 %v783, 0.0
    %v792 = vmax.f32 %v784, 0.0
    %v793 = vmax.f32 %v785, 0.0
    %v794 = vmax.f32 %v786, 0.0
    %v795 = vmax.f32 %v787, 0.0
    %v796 = vmax.f32 %v788, 0.0
    %v797 = vmul.f32 %v372, -256.0
    %v798 = vmul.f32 %v373, -256.0
    %v799 = vmul.f32 %v374, -256.0
    %v800 = vmul.f32 %v375, -256.0
    %v801 = vmul.f32 %v376, -256.0
    %v802 = vmul.f32 %v377, -256.0
    %v803 = vmul.f32 %v378, -256.0
    %v804 = vmul.f32 %v379, -256.0
    %v805 = vmul.f32 %v797, 1.442695
    %v806 = vpow.pop %v805
    %v807 = vmul.f32 %v798, 1.442695
    %v808 = vpow.pop %v807
    %v809 = vmul.f32 %v799, 1.442695
    %v810 = vpow.pop %v809
    %v811 = vmul.f32 %v800, 1.442695
    %v812 = vpow.pop %v811
    %v813 = vmul.f32 %v801, 1.442695
    %v814 = vpow.pop %v813
    %v815 = vmul.f32 %v802, 1.442695
    %v816 = vpow.pop %v815
    %v817 = vmul.f32 %v803, 1.442695
    %v818 = vpow.pop %v817
    %v819 = vmul.f32 %v804, 1.442695
    %v820 = vpow.pop %v819
    %v821 = vadd.f32 %v806, %v808
    %v822 = vadd.f32 %v821, %v810
    %v823 = vadd.f32 %v822, %v812
    %v824 = vadd.f32 %v823, %v814
    %v825 = vadd.f32 %v824, %v816
    %v826 = vadd.f32 %v825, %v818
    %v827 = vadd.f32 %v826, %v820
    %v828 = vmul.f32 %v732, %v827
    %v829 = vadd.f32 %v828, 1e-09
    %v830 = vrcp.pop %v829
    %v831 = vmul.f32 %v829, %v830
    %v832 = vsub.f32 2.0, %v831
    %v833 = vmul.f32 %v830, %v832
    %v834 = vmul.f32 %v732, %v833
    %v835 = vmul.f32 %v806, %v789
    %v836 = vmul.f32 %v808, %v790
    %v837 = vmul.f32 %v810, %v791
    %v838 = vmul.f32 %v812, %v792
    %v839 = vmul.f32 %v814, %v793
    %v840 = vmul.f32 %v816, %v794
    %v841 = vmul.f32 %v818, %v795
    %v842 = vmul.f32 %v820, %v796
    %v843 = vadd.f32 %v835, %v836
    %v844 = vadd.f32 %v843, %v837
    %v845 = vadd.f32 %v844, %v838
    %v846 = vadd.f32 %v845, %v839
    %v847 = vadd.f32 %v846, %v840
    %v848 = vadd.f32 %v847, %v841
    %v849 = vadd.f32 %v848, %v842
    %v850 = vmul.f32 %v834, %v849
    %v851 = vadd.f32 %v850, 1e-09
    %v852 = vrcp.pop %v851
    %v853 = vmul.f32 %v851, %v852
    %v854 = vsub.f32 2.0, %v853
    %v855 = vmul.f32 %v852, %v854
    %v856 = vmul.f32 %v732, %v855
    %v857 = vmin.f32 %v856, 1.0
    %v858 = vmul.f32 %v834, %v857
    %v859 = vmul.f32 %v835, %v858
    %v860 = vmul.f32 %v836, %v858
    %v861 = vmul.f32 %v837, %v858
    %v862 = vmul.f32 %v838, %v858
    %v863 = vmul.f32 %v839, %v858
    %v864 = vmul.f32 %v840, %v858
    %v865 = vmul.f32 %v841, %v858
    %v866 = vmul.f32 %v842, %v858
    %v867 = vadd.f32 %v722, %v859
    %v868 = vadd.f32 %v723, %v860
    %v869 = vadd.f32 %v724, %v861
    %v870 = vadd.f32 %v725, %v862
    %v871 = vadd.f32 %v726, %v863
    %v872 = vadd.f32 %v727, %v864
    %v873 = vadd.f32 %v728, %v865
    %v874 = vadd.f32 %v729, %v866
    %v875 = vmul.f32 %v858, %v849
    %v876 = vsub.f32 %v732, %v875
    %v877 = vmax.f32 %v876, 0.0
    %v878 = vrot.slane %v859, 4
    %v879 = vadd.f32 %v859, %v878
    %v880 = vrot.slane %v879, 2
    %v881 = vadd.f32 %v879, %v880
    %v882 = vrot.slane %v881, 1
    %v883 = vadd.f32 %v881, %v882
    %v884 = vrot.slane %v860, 4
    %v885 = vadd.f32 %v860, %v884
    %v886 = vrot.slane %v885, 2
    %v887 = vadd.f32 %v885, %v886
    %v888 = vrot.slane %v887, 1
    %v889 = vadd.f32 %v887, %v888
    %v890 = vrot.slane %v861, 4
    %v891 = vadd.f32 %v861, %v890
    %v892 = vrot.slane %v891, 2
    %v893 = vadd.f32 %v891, %v892
    %v894 = vrot.slane %v893, 1
    %v895 = vadd.f32 %v893, %v894
    %v896 = vrot.slane %v862, 4
    %v897 = vadd.f32 %v862, %v896
    %v898 = vrot.slane %v897, 2
    %v899 = vadd.f32 %v897, %v898
    %v900 = vrot.slane %v899, 1
    %v901 = vadd.f32 %v899, %v900
    %v902 = vrot.slane %v863, 4
    %v903 = vadd.f32 %v863, %v902
    %v904 = vrot.slane %v903, 2
    %v905 = vadd.f32 %v903, %v904
    %v906 = vrot.slane %v905, 1
    %v907 = vadd.f32 %v905, %v906
    %v908 = vrot.slane %v864, 4
    %v909 = vadd.f32 %v864, %v908
    %v910 = vrot.slane %v909, 2
    %v911 = vadd.f32 %v909, %v910
    %v912 = vrot.slane %v911, 1
    %v913 = vadd.f32 %v911, %v912
    %v914 = vrot.slane %v865, 4
    %v915 = vadd.f32 %v865, %v914
    %v916 = vrot.slane %v915, 2
    %v917 = vadd.f32 %v915, %v916
    %v918 = vrot.slane %v917, 1
    %v919 = vadd.f32 %v917, %v918
    %v920 = vrot.slane %v866, 4
    %v921 = vadd.f32 %v866, %v920
    %v922 = vrot.slane %v921, 2
    %v923 = vadd.f32 %v921, %v922
    %v924 = vrot.slane %v923, 1
    %v925 = vadd.f32 %v923, %v924
    %v926 = vsub.f32 %v789, %v883
    %v927 = vsub.f32 %v790, %v889
    %v928 = vsub.f32 %v791, %v895
    %v929 = vsub.f32 %v792, %v901
    %v930 = vsub.f32 %v793, %v907
    %v931 = vsub.f32 %v794, %v913
    %v932 = vsub.f32 %v795, %v919
    %v933 = vsub.f32 %v796, %v925
    %v934 = vmax.f32 %v926, 0.0
    %v935 = vmax.f32 %v927, 0.0
    %v936 = vmax.f32 %v928, 0.0
    %v937 = vmax.f32 %v929, 0.0
    %v938 = vmax.f32 %v930, 0.0
    %v939 = vmax.f32 %v931, 0.0
    %v940 = vmax.f32 %v932, 0.0
    %v941 = vmax.f32 %v933, 0.0
    %v942 = vmul.f32 %v372, -64.0
    %v943 = vmul.f32 %v373, -64.0
    %v944 = vmul.f32 %v374, -64.0
    %v945 = vmul.f32 %v375, -64.0
    %v946 = vmul.f32 %v376, -64.0
    %v947 = vmul.f32 %v377, -64.0
    %v948 = vmul.f32 %v378, -64.0
    %v949 = vmul.f32 %v379, -64.0
    %v950 = vmul.f32 %v942, 1.442695
    %v951 = vpow.pop %v950
    %v952 = vmul.f32 %v943, 1.442695
    %v953 = vpow.pop %v952
    %v954 = vmul.f32 %v944, 1.442695
    %v955 = vpow.pop %v954
    %v956 = vmul.f32 %v945, 1.442695
    %v957 = vpow.pop %v956
    %v958 = vmul.f32 %v946, 1.442695
    %v959 = vpow.pop %v958
    %v960 = vmul.f32 %v947, 1.442695
    %v961 = vpow.pop %v960
    %v962 = vmul.f32 %v948, 1.442695
    %v963 = vpow.pop %v962
    %v964 = vmul.f32 %v949, 1.442695
    %v965 = vpow.pop %v964
    %v966 = vadd.f32 %v951, %v953
    %v967 = vadd.f32 %v966, %v955
    %v968 = vadd.f32 %v967, %v957
    %v969 = vadd.f32 %v968, %v959
    %v970 = vadd.f32 %v969, %v961
    %v971 = vadd.f32 %v970, %v963
    %v972 = vadd.f32 %v971, %v965
    %v973 = vmul.f32 %v877, %v972
    %v974 = vadd.f32 %v973, 1e-09
    %v975 = vrcp.pop %v974
    %v976 = vmul.f32 %v974, %v975
    %v977 = vsub.f32 2.0, %v976
    %v978 = vmul.f32 %v975, %v977
    %v979 = vmul.f32 %v877, %v978
    %v980 = vmul.f32 %v951, %v934
    %v981 = vmul.f32 %v953, %v935
    %v982 = vmul.f32 %v955, %v936
    %v983 = vmul.f32 %v957, %v937
    %v984 = vmul.f32 %v959, %v938
    %v985 = vmul.f32 %v961, %v939
    %v986 = vmul.f32 %v963, %v940
    %v987 = vmul.f32 %v965, %v941
    %v988 = vadd.f32 %v980, %v981
    %v989 = vadd.f32 %v988, %v982
    %v990 = vadd.f32 %v989, %v983
    %v991 = vadd.f32 %v990, %v984
    %v992 = vadd.f32 %v991, %v985
    %v993 = vadd.f32 %v992, %v986
    %v994 = vadd.f32 %v993, %v987
    %v995 = vmul.f32 %v979, %v994
    %v996 = vadd.f32 %v995, 1e-09
    %v997 = vrcp.pop %v996
    %v998 = vmul.f32 %v996, %v997
    %v999 = vsub.f32 2.0, %v998
    %v1000 = vmul.f32 %v997, %v999
    %v1001 = vmul.f32 %v877, %v1000
    %v1002 = vmin.f32 %v1001, 1.0
    %v1003 = vmul.f32 %v979, %v1002
    %v1004 = vmul.f32 %v980, %v1003
    %v1005 = vmul.f32 %v981, %v1003
    %v1006 = vmul.f32 %v982, %v1003
    %v1007 = vmul.f32 %v983, %v1003
    %v1008 = vmul.f32 %v984, %v1003
    %v1009 = vmul.f32 %v985, %v1003
    %v1010 = vmul.f32 %v986, %v1003
    %v1011 = vmul.f32 %v987, %v1003
    %v1012 = vadd.f32 %v867, %v1004
    %v1013 = vadd.f32 %v868, %v1005
    %v1014 = vadd.f32 %v869, %v1006
    %v1015 = vadd.f32 %v870, %v1007
    %v1016 = vadd.f32 %v871, %v1008
    %v1017 = vadd.f32 %v872, %v1009
    %v1018 = vadd.f32 %v873, %v1010
    %v1019 = vadd.f32 %v874, %v1011
    %v1020 = vmul.f32 %v1003, %v994
    %v1021 = vsub.f32 %v877, %v1020
    %v1022 = vmax.f32 %v1021, 0.0
    %v1023 = vrot.slane %v1004, 4
    %v1024 = vadd.f32 %v1004, %v1023
    %v1025 = vrot.slane %v1024, 2
    %v1026 = vadd.f32 %v1024, %v1025
    %v1027 = vrot.slane %v1026, 1
    %v1028 = vadd.f32 %v1026, %v1027
    %v1029 = vrot.slane %v1005, 4
    %v1030 = vadd.f32 %v1005, %v1029
    %v1031 = vrot.slane %v1030, 2
    %v1032 = vadd.f32 %v1030, %v1031
    %v1033 = vrot.slane %v1032, 1
    %v1034 = vadd.f32 %v1032, %v1033
    %v1035 = vrot.slane %v1006, 4
    %v1036 = vadd.f32 %v1006, %v1035
    %v1037 = vrot.slane %v1036, 2
    %v1038 = vadd.f32 %v1036, %v1037
    %v1039 = vrot.slane %v1038, 1
    %v1040 = vadd.f32 %v1038, %v1039
    %v1041 = vrot.slane %v1007, 4
    %v1042 = vadd.f32 %v1007, %v1041
    %v1043 = vrot.slane %v1042, 2
    %v1044 = vadd.f32 %v1042, %v1043
    %v1045 = vrot.slane %v1044, 1
    %v1046 = vadd.f32 %v1044, %v1045
    %v1047 = vrot.slane %v1008, 4
    %v1048 = vadd.f32 %v1008, %v1047
    %v1049 = vrot.slane %v1048, 2
    %v1050 = vadd.f32 %v1048, %v1049
    %v1051 = vrot.slane %v1050, 1
    %v1052 = vadd.f32 %v1050, %v1051
    %v1053 = vrot.slane %v1009, 4
    %v1054 = vadd.f32 %v1009, %v1053
    %v1055 = vrot.slane %v1054, 2
    %v1056 = vadd.f32 %v1054, %v1055
    %v1057 = vrot.slane %v1056, 1
    %v1058 = vadd.f32 %v1056, %v1057
    %v1059 = vrot.slane %v1010, 4
    %v1060 = vadd.f32 %v1010, %v1059
    %v1061 = vrot.slane %v1060, 2
    %v1062 = vadd.f32 %v1060, %v1061
    %v1063 = vrot.slane %v1062, 1
    %v1064 = vadd.f32 %v1062, %v1063
    %v1065 = vrot.slane %v1011, 4
    %v1066 = vadd.f32 %v1011, %v1065
    %v1067 = vrot.slane %v1066, 2
    %v1068 = vadd.f32 %v1066, %v1067
    %v1069 = vrot.slane %v1068, 1
    %v1070 = vadd.f32 %v1068, %v1069
    %v1071 = vsub.f32 %v934, %v1028
    %v1072 = vsub.f32 %v935, %v1034
    %v1073 = vsub.f32 %v936, %v1040
    %v1074 = vsub.f32 %v937, %v1046
    %v1075 = vsub.f32 %v938, %v1052
    %v1076 = vsub.f32 %v939, %v1058
    %v1077 = vsub.f32 %v940, %v1064
    %v1078 = vsub.f32 %v941, %v1070
    %v1079 = vmax.f32 %v1071, 0.0
    %v1080 = vmax.f32 %v1072, 0.0
    %v1081 = vmax.f32 %v1073, 0.0
    %v1082 = vmax.f32 %v1074, 0.0
    %v1083 = vmax.f32 %v1075, 0.0
    %v1084 = vmax.f32 %v1076, 0.0
    %v1085 = vmax.f32 %v1077, 0.0
    %v1086 = vmax.f32 %v1078, 0.0
    %v1087 = vmul.f32 %v372, -16.0
    %v1088 = vmul.f32 %v373, -16.0
    %v1089 = vmul.f32 %v374, -16.0
    %v1090 = vmul.f32 %v375, -16.0
    %v1091 = vmul.f32 %v376, -16.0
    %v1092 = vmul.f32 %v377, -16.0
    %v1093 = vmul.f32 %v378, -16.0
    %v1094 = vmul.f32 %v379, -16.0
    %v1095 = vmul.f32 %v1087, 1.442695
    %v1096 = vpow.pop %v1095
    %v1097 = vmul.f32 %v1088, 1.442695
    %v1098 = vpow.pop %v1097
    %v1099 = vmul.f32 %v1089, 1.442695
    %v1100 = vpow.pop %v1099
    %v1101 = vmul.f32 %v1090, 1.442695
    %v1102 = vpow.pop %v1101
    %v1103 = vmul.f32 %v1091, 1.442695
    %v1104 = vpow.pop %v1103
    %v1105 = vmul.f32 %v1092, 1.442695
    %v1106 = vpow.pop %v1105
    %v1107 = vmul.f32 %v1093, 1.442695
    %v1108 = vpow.pop %v1107
    %v1109 = vmul.f32 %v1094, 1.442695
    %v1110 = vpow.pop %v1109
    %v1111 = vadd.f32 %v1096, %v1098
    %v1112 = vadd.f32 %v1111, %v1100
    %v1113 = vadd.f32 %v1112, %v1102
    %v1114 = vadd.f32 %v1113, %v1104
    %v1115 = vadd.f32 %v1114, %v1106
    %v1116 = vadd.f32 %v1115, %v1108
    %v1117 = vadd.f32 %v1116, %v1110
    %v1118 = vmul.f32 %v1022, %v1117
    %v1119 = vadd.f32 %v1118, 1e-09
    %v1120 = vrcp.pop %v1119
    %v1121 = vmul.f32 %v1119, %v1120
    %v1122 = vsub.f32 2.0, %v1121
    %v1123 = vmul.f32 %v1120, %v1122
    %v1124 = vmul.f32 %v1022, %v1123
    %v1125 = vmul.f32 %v1096, %v1079
    %v1126 = vmul.f32 %v1098, %v1080
    %v1127 = vmul.f32 %v1100, %v1081
    %v1128 = vmul.f32 %v1102, %v1082
    %v1129 = vmul.f32 %v1104, %v1083
    %v1130 = vmul.f32 %v1106, %v1084
    %v1131 = vmul.f32 %v1108, %v1085
    %v1132 = vmul.f32 %v1110, %v1086
    %v1133 = vadd.f32 %v1125, %v1126
    %v1134 = vadd.f32 %v1133, %v1127
    %v1135 = vadd.f32 %v1134, %v1128
    %v1136 = vadd.f32 %v1135, %v1129
    %v1137 = vadd.f32 %v1136, %v1130
    %v1138 = vadd.f32 %v1137, %v1131
    %v1139 = vadd.f32 %v1138, %v1132
    %v1140 = vmul.f32 %v1124, %v1139
    %v1141 = vadd.f32 %v1140, 1e-09
    %v1142 = vrcp.pop %v1141
    %v1143 = vmul.f32 %v1141, %v1142
    %v1144 = vsub.f32 2.0, %v1143
    %v1145 = vmul.f32 %v1142, %v1144
    %v1146 = vmul.f32 %v1022, %v1145
    %v1147 = vmin.f32 %v1146, 1.0
    %v1148 = vmul.f32 %v1124, %v1147
    %v1149 = vmul.f32 %v1125, %v1148
    %v1150 = vmul.f32 %v1126, %v1148
    %v1151 = vmul.f32 %v1127, %v1148
    %v1152 = vmul.f32 %v1128, %v1148
    %v1153 = vmul.f32 %v1129, %v1148
    %v1154 = vmul.f32 %v1130, %v1148
    %v1155 = vmul.f32 %v1131, %v1148
    %v1156 = vmul.f32 %v1132, %v1148
    %v1157 = vadd.f32 %v1012, %v1149
    %v1158 = vadd.f32 %v1013, %v1150
    %v1159 = vadd.f32 %v1014, %v1151
    %v1160 = vadd.f32 %v1015, %v1152
    %v1161 = vadd.f32 %v1016, %v1153
    %v1162 = vadd.f32 %v1017, %v1154
    %v1163 = vadd.f32 %v1018, %v1155
    %v1164 = vadd.f32 %v1019, %v1156
    %v1165 = vmul.f32 %v1148, %v1139
    %v1166 = vsub.f32 %v1022, %v1165
    %v1167 = vmax.f32 %v1166, 0.0
    %v1168 = vrot.slane %v1149, 4
    %v1169 = vadd.f32 %v1149, %v1168
    %v1170 = vrot.slane %v1169, 2
    %v1171 = vadd.f32 %v1169, %v1170
    %v1172 = vrot.slane %v1171, 1
    %v1173 = vadd.f32 %v1171, %v1172
    %v1174 = vrot.slane %v1150, 4
    %v1175 = vadd.f32 %v1150, %v1174
    %v1176 = vrot.slane %v1175, 2
    %v1177 = vadd.f32 %v1175, %v1176
    %v1178 = vrot.slane %v1177, 1
    %v1179 = vadd.f32 %v1177, %v1178
    %v1180 = vrot.slane %v1151, 4
    %v1181 = vadd.f32 %v1151, %v1180
    %v1182 = vrot.slane %v1181, 2
    %v1183 = vadd.f32 %v1181, %v1182
    %v1184 = vrot.slane %v1183, 1
    %v1185 = vadd.f32 %v1183, %v1184
    %v1186 = vrot.slane %v1152, 4
    %v1187 = vadd.f32 %v1152, %v1186
    %v1188 = vrot.slane %v1187, 2
    %v1189 = vadd.f32 %v1187, %v1188
    %v1190 = vrot.slane %v1189, 1
    %v1191 = vadd.f32 %v1189, %v1190
    %v1192 = vrot.slane %v1153, 4
    %v1193 = vadd.f32 %v1153, %v1192
    %v1194 = vrot.slane %v1193, 2
    %v1195 = vadd.f32 %v1193, %v1194
    %v1196 = vrot.slane %v1195, 1
    %v1197 = vadd.f32 %v1195, %v1196
    %v1198 = vrot.slane %v1154, 4
    %v1199 = vadd.f32 %v1154, %v1198
    %v1200 = vrot.slane %v1199, 2
    %v1201 = vadd.f32 %v1199, %v1200
    %v1202 = vrot.slane %v1201, 1
    %v1203 = vadd.f32 %v1201, %v1202
    %v1204 = vrot.slane %v1155, 4
    %v1205 = vadd.f32 %v1155, %v1204
    %v1206 = vrot.slane %v1205, 2
    %v1207 = vadd.f32 %v1205, %v1206
    %v1208 = vrot.slane %v1207, 1
    %v1209 = vadd.f32 %v1207, %v1208
    %v1210 = vrot.slane %v1156, 4
    %v1211 = vadd.f32 %v1156, %v1210
    %v1212 = vrot.slane %v1211, 2
    %v1213 = vadd.f32 %v1211, %v1212
    %v1214 = vrot.slane %v1213, 1
    %v1215 = vadd.f32 %v1213, %v1214
    %v1216 = vsub.f32 %v1079, %v1173
    %v1217 = vsub.f32 %v1080, %v1179
    %v1218 = vsub.f32 %v1081, %v1185
    %v1219 = vsub.f32 %v1082, %v1191
    %v1220 = vsub.f32 %v1083, %v1197
    %v1221 = vsub.f32 %v1084, %v1203
    %v1222 = vsub.f32 %v1085, %v1209
    %v1223 = vsub.f32 %v1086, %v1215
    %v1224 = vmax.f32 %v1216, 0.0
    %v1225 = vmax.f32 %v1217, 0.0
    %v1226 = vmax.f32 %v1218, 0.0
    %v1227 = vmax.f32 %v1219, 0.0
    %v1228 = vmax.f32 %v1220, 0.0
    %v1229 = vmax.f32 %v1221, 0.0
    %v1230 = vmax.f32 %v1222, 0.0
    %v1231 = vmax.f32 %v1223, 0.0
    %v1232 = vmul.f32 %v372, -4.0
    %v1233 = vmul.f32 %v373, -4.0
    %v1234 = vmul.f32 %v374, -4.0
    %v1235 = vmul.f32 %v375, -4.0
    %v1236 = vmul.f32 %v376, -4.0
    %v1237 = vmul.f32 %v377, -4.0
    %v1238 = vmul.f32 %v378, -4.0
    %v1239 = vmul.f32 %v379, -4.0
    %v1240 = vmul.f32 %v1232, 1.442695
    %v1241 = vpow.pop %v1240
    %v1242 = vmul.f32 %v1233, 1.442695
    %v1243 = vpow.pop %v1242
    %v1244 = vmul.f32 %v1234, 1.442695
    %v1245 = vpow.pop %v1244
    %v1246 = vmul.f32 %v1235, 1.442695
    %v1247 = vpow.pop %v1246
    %v1248 = vmul.f32 %v1236, 1.442695
    %v1249 = vpow.pop %v1248
    %v1250 = vmul.f32 %v1237, 1.442695
    %v1251 = vpow.pop %v1250
    %v1252 = vmul.f32 %v1238, 1.442695
    %v1253 = vpow.pop %v1252
    %v1254 = vmul.f32 %v1239, 1.442695
    %v1255 = vpow.pop %v1254
    %v1256 = vadd.f32 %v1241, %v1243
    %v1257 = vadd.f32 %v1256, %v1245
    %v1258 = vadd.f32 %v1257, %v1247
    %v1259 = vadd.f32 %v1258, %v1249
    %v1260 = vadd.f32 %v1259, %v1251
    %v1261 = vadd.f32 %v1260, %v1253
    %v1262 = vadd.f32 %v1261, %v1255
    %v1263 = vmul.f32 %v1167, %v1262
    %v1264 = vadd.f32 %v1263, 1e-09
    %v1265 = vrcp.pop %v1264
    %v1266 = vmul.f32 %v1264, %v1265
    %v1267 = vsub.f32 2.0, %v1266
    %v1268 = vmul.f32 %v1265, %v1267
    %v1269 = vmul.f32 %v1167, %v1268
    %v1270 = vmul.f32 %v1241, %v1224
    %v1271 = vmul.f32 %v1243, %v1225
    %v1272 = vmul.f32 %v1245, %v1226
    %v1273 = vmul.f32 %v1247, %v1227
    %v1274 = vmul.f32 %v1249, %v1228
    %v1275 = vmul.f32 %v1251, %v1229
    %v1276 = vmul.f32 %v1253, %v1230
    %v1277 = vmul.f32 %v1255, %v1231
    %v1278 = vadd.f32 %v1270, %v1271
    %v1279 = vadd.f32 %v1278, %v1272
    %v1280 = vadd.f32 %v1279, %v1273
    %v1281 = vadd.f32 %v1280, %v1274
    %v1282 = vadd.f32 %v1281, %v1275
    %v1283 = vadd.f32 %v1282, %v1276
    %v1284 = vadd.f32 %v1283, %v1277
    %v1285 = vmul.f32 %v1269, %v1284
    %v1286 = vadd.f32 %v1285, 1e-09
    %v1287 = vrcp.pop %v1286
    %v1288 = vmul.f32 %v1286, %v1287
    %v1289 = vsub.f32 2.0, %v1288
    %v1290 = vmul.f32 %v1287, %v1289
    %v1291 = vmul.f32 %v1167, %v1290
    %v1292 = vmin.f32 %v1291, 1.0
    %v1293 = vmul.f32 %v1269, %v1292
    %v1294 = vmul.f32 %v1270, %v1293
    %v1295 = vmul.f32 %v1271, %v1293
    %v1296 = vmul.f32 %v1272, %v1293
    %v1297 = vmul.f32 %v1273, %v1293
    %v1298 = vmul.f32 %v1274, %v1293
    %v1299 = vmul.f32 %v1275, %v1293
    %v1300 = vmul.f32 %v1276, %v1293
    %v1301 = vmul.f32 %v1277, %v1293
    %v1302 = vadd.f32 %v1157, %v1294
    %v1303 = vadd.f32 %v1158, %v1295
    %v1304 = vadd.f32 %v1159, %v1296
    %v1305 = vadd.f32 %v1160, %v1297
    %v1306 = vadd.f32 %v1161, %v1298
    %v1307 = vadd.f32 %v1162, %v1299
    %v1308 = vadd.f32 %v1163, %v1300
    %v1309 = vadd.f32 %v1164, %v1301
    %v1310 = vmul.f32 %v1293, %v1284
    %v1311 = vsub.f32 %v1167, %v1310
    %v1312 = vmax.f32 %v1311, 0.0
    %v1313 = vrot.slane %v1294, 4
    %v1314 = vadd.f32 %v1294, %v1313
    %v1315 = vrot.slane %v1314, 2
    %v1316 = vadd.f32 %v1314, %v1315
    %v1317 = vrot.slane %v1316, 1
    %v1318 = vadd.f32 %v1316, %v1317
    %v1319 = vrot.slane %v1295, 4
    %v1320 = vadd.f32 %v1295, %v1319
    %v1321 = vrot.slane %v1320, 2
    %v1322 = vadd.f32 %v1320, %v1321
    %v1323 = vrot.slane %v1322, 1
    %v1324 = vadd.f32 %v1322, %v1323
    %v1325 = vrot.slane %v1296, 4
    %v1326 = vadd.f32 %v1296, %v1325
    %v1327 = vrot.slane %v1326, 2
    %v1328 = vadd.f32 %v1326, %v1327
    %v1329 = vrot.slane %v1328, 1
    %v1330 = vadd.f32 %v1328, %v1329
    %v1331 = vrot.slane %v1297, 4
    %v1332 = vadd.f32 %v1297, %v1331
    %v1333 = vrot.slane %v1332, 2
    %v1334 = vadd.f32 %v1332, %v1333
    %v1335 = vrot.slane %v1334, 1
    %v1336 = vadd.f32 %v1334, %v1335
    %v1337 = vrot.slane %v1298, 4
    %v1338 = vadd.f32 %v1298, %v1337
    %v1339 = vrot.slane %v1338, 2
    %v1340 = vadd.f32 %v1338, %v1339
    %v1341 = vrot.slane %v1340, 1
    %v1342 = vadd.f32 %v1340, %v1341
    %v1343 = vrot.slane %v1299, 4
    %v1344 = vadd.f32 %v1299, %v1343
    %v1345 = vrot.slane %v1344, 2
    %v1346 = vadd.f32 %v1344, %v1345
    %v1347 = vrot.slane %v1346, 1
    %v1348 = vadd.f32 %v1346, %v1347
    %v1349 = vrot.slane %v1300, 4
    %v1350 = vadd.f32 %v1300, %v1349
    %v1351 = vrot.slane %v1350, 2
    %v1352 = vadd.f32 %v1350, %v1351
    %v1353 = vrot.slane %v1352, 1
    %v1354 = vadd.f32 %v1352, %v1353
    %v1355 = vrot.slane %v1301, 4
    %v1356 = vadd.f32 %v1301, %v1355
    %v1357 = vrot.slane %v1356, 2
    %v1358 = vadd.f32 %v1356, %v1357
    %v1359 = vrot.slane %v1358, 1
    %v1360 = vadd.f32 %v1358, %v1359
    %v1361 = vsub.f32 %v1224, %v1318
    %v1362 = vsub.f32 %v1225, %v1324
    %v1363 = vsub.f32 %v1226, %v1330
    %v1364 = vsub.f32 %v1227, %v1336
    %v1365 = vsub.f32 %v1228, %v1342
    %v1366 = vsub.f32 %v1229, %v1348
    %v1367 = vsub.f32 %v1230, %v1354
    %v1368 = vsub.f32 %v1231, %v1360
    %v1369 = vmax.f32 %v1361, 0.0
    %v1370 = vmax.f32 %v1362, 0.0
    %v1371 = vmax.f32 %v1363, 0.0
    %v1372 = vmax.f32 %v1364, 0.0
    %v1373 = vmax.f32 %v1365, 0.0
    %v1374 = vmax.f32 %v1366, 0.0
    %v1375 = vmax.f32 %v1367, 0.0
    %v1376 = vmax.f32 %v1368, 0.0
    %v1377 = vmul.f32 %v372, -1.0
    %v1378 = vmul.f32 %v373, -1.0
    %v1379 = vmul.f32 %v374, -1.0
    %v1380 = vmul.f32 %v375, -1.0
    %v1381 = vmul.f32 %v376, -1.0
    %v1382 = vmul.f32 %v377, -1.0
    %v1383 = vmul.f32 %v378, -1.0
    %v1384 = vmul.f32 %v379, -1.0
    %v1385 = vmul.f32 %v1377, 1.442695
    %v1386 = vpow.pop %v1385
    %v1387 = vmul.f32 %v1378, 1.442695
    %v1388 = vpow.pop %v1387
    %v1389 = vmul.f32 %v1379, 1.442695
    %v1390 = vpow.pop %v1389
    %v1391 = vmul.f32 %v1380, 1.442695
    %v1392 = vpow.pop %v1391
    %v1393 = vmul.f32 %v1381, 1.442695
    %v1394 = vpow.pop %v1393
    %v1395 = vmul.f32 %v1382, 1.442695
    %v1396 = vpow.pop %v1395
    %v1397 = vmul.f32 %v1383, 1.442695
    %v1398 = vpow.pop %v1397
    %v1399 = vmul.f32 %v1384, 1.442695
    %v1400 = vpow.pop %v1399
    %v1401 = vadd.f32 %v1386, %v1388
    %v1402 = vadd.f32 %v1401, %v1390
    %v1403 = vadd.f32 %v1402, %v1392
    %v1404 = vadd.f32 %v1403, %v1394
    %v1405 = vadd.f32 %v1404, %v1396
    %v1406 = vadd.f32 %v1405, %v1398
    %v1407 = vadd.f32 %v1406, %v1400
    %v1408 = vmul.f32 %v1312, %v1407
    %v1409 = vadd.f32 %v1408, 1e-09
    %v1410 = vrcp.pop %v1409
    %v1411 = vmul.f32 %v1409, %v1410
    %v1412 = vsub.f32 2.0, %v1411
    %v1413 = vmul.f32 %v1410, %v1412
    %v1414 = vmul.f32 %v1312, %v1413
    %v1415 = vmul.f32 %v1386, %v1369
    %v1416 = vmul.f32 %v1388, %v1370
    %v1417 = vmul.f32 %v1390, %v1371
    %v1418 = vmul.f32 %v1392, %v1372
    %v1419 = vmul.f32 %v1394, %v1373
    %v1420 = vmul.f32 %v1396, %v1374
    %v1421 = vmul.f32 %v1398, %v1375
    %v1422 = vmul.f32 %v1400, %v1376
    %v1423 = vadd.f32 %v1415, %v1416
    %v1424 = vadd.f32 %v1423, %v1417
    %v1425 = vadd.f32 %v1424, %v1418
    %v1426 = vadd.f32 %v1425, %v1419
    %v1427 = vadd.f32 %v1426, %v1420
    %v1428 = vadd.f32 %v1427, %v1421
    %v1429 = vadd.f32 %v1428, %v1422
    %v1430 = vmul.f32 %v1414, %v1429
    %v1431 = vadd.f32 %v1430, 1e-09
    %v1432 = vrcp.pop %v1431
    %v1433 = vmul.f32 %v1431, %v1432
    %v1434 = vsub.f32 2.0, %v1433
    %v1435 = vmul.f32 %v1432, %v1434
    %v1436 = vmul.f32 %v1312, %v1435
    %v1437 = vmin.f32 %v1436, 1.0
    %v1438 = vmul.f32 %v1414, %v1437
    %v1439 = vmul.f32 %v1415, %v1438
    %v1440 = vmul.f32 %v1416, %v1438
    %v1441 = vmul.f32 %v1417, %v1438
    %v1442 = vmul.f32 %v1418, %v1438
    %v1443 = vmul.f32 %v1419, %v1438
    %v1444 = vmul.f32 %v1420, %v1438
    %v1445 = vmul.f32 %v1421, %v1438
    %v1446 = vmul.f32 %v1422, %v1438
    %v1447 = vadd.f32 %v1302, %v1439
    %v1448 = vadd.f32 %v1303, %v1440
    %v1449 = vadd.f32 %v1304, %v1441
    %v1450 = vadd.f32 %v1305, %v1442
    %v1451 = vadd.f32 %v1306, %v1443
    %v1452 = vadd.f32 %v1307, %v1444
    %v1453 = vadd.f32 %v1308, %v1445
    %v1454 = vadd.f32 %v1309, %v1446
    %v1455 = vmul.f32 %v1438, %v1429
    %v1456 = vsub.f32 %v1312, %v1455
    %v1457 = vmax.f32 %v1456, 0.0
    %v1458 = vrot.slane %v1439, 4
    %v1459 = vadd.f32 %v1439, %v1458
    %v1460 = vrot.slane %v1459, 2
    %v1461 = vadd.f32 %v1459, %v1460
    %v1462 = vrot.slane %v1461, 1
    %v1463 = vadd.f32 %v1461, %v1462
    %v1464 = vrot.slane %v1440, 4
    %v1465 = vadd.f32 %v1440, %v1464
    %v1466 = vrot.slane %v1465, 2
    %v1467 = vadd.f32 %v1465, %v1466
    %v1468 = vrot.slane %v1467, 1
    %v1469 = vadd.f32 %v1467, %v1468
    %v1470 = vrot.slane %v1441, 4
    %v1471 = vadd.f32 %v1441, %v1470
    %v1472 = vrot.slane %v1471, 2
    %v1473 = vadd.f32 %v1471, %v1472
    %v1474 = vrot.slane %v1473, 1
    %v1475 = vadd.f32 %v1473, %v1474
    %v1476 = vrot.slane %v1442, 4
    %v1477 = vadd.f32 %v1442, %v1476
    %v1478 = vrot.slane %v1477, 2
    %v1479 = vadd.f32 %v1477, %v1478
    %v1480 = vrot.slane %v1479, 1
    %v1481 = vadd.f32 %v1479, %v1480
    %v1482 = vrot.slane %v1443, 4
    %v1483 = vadd.f32 %v1443, %v1482
    %v1484 = vrot.slane %v1483, 2
    %v1485 = vadd.f32 %v1483, %v1484
    %v1486 = vrot.slane %v1485, 1
    %v1487 = vadd.f32 %v1485, %v1486
    %v1488 = vrot.slane %v1444, 4
    %v1489 = vadd.f32 %v1444, %v1488
    %v1490 = vrot.slane %v1489, 2
    %v1491 = vadd.f32 %v1489, %v1490
    %v1492 = vrot.slane %v1491, 1
    %v1493 = vadd.f32 %v1491, %v1492
    %v1494 = vrot.slane %v1445, 4
    %v1495 = vadd.f32 %v1445, %v1494
    %v1496 = vrot.slane %v1495, 2
    %v1497 = vadd.f32 %v1495, %v1496
    %v1498 = vrot.slane %v1497, 1
    %v1499 = vadd.f32 %v1497, %v1498
    %v1500 = vrot.slane %v1446, 4
    %v1501 = vadd.f32 %v1446, %v1500
    %v1502 = vrot.slane %v1501, 2
    %v1503 = vadd.f32 %v1501, %v1502
    %v1504 = vrot.slane %v1503, 1
    %v1505 = vadd.f32 %v1503, %v1504
    %v1506 = vsub.f32 %v1369, %v1463
    %v1507 = vsub.f32 %v1370, %v1469
    %v1508 = vsub.f32 %v1371, %v1475
    %v1509 = vsub.f32 %v1372, %v1481
    %v1510 = vsub.f32 %v1373, %v1487
    %v1511 = vsub.f32 %v1374, %v1493
    %v1512 = vsub.f32 %v1375, %v1499
    %v1513 = vsub.f32 %v1376, %v1505
    %v1514 = vmax.f32 %v1506, 0.0
    %v1515 = vmax.f32 %v1507, 0.0
    %v1516 = vmax.f32 %v1508, 0.0
    %v1517 = vmax.f32 %v1509, 0.0
    %v1518 = vmax.f32 %v1510, 0.0
    %v1519 = vmax.f32 %v1511, 0.0
    %v1520 = vmax.f32 %v1512, 0.0
    %v1521 = vmax.f32 %v1513, 0.0
    %v1522 = vmul.f32 %v372, -0.25
    %v1523 = vmul.f32 %v373, -0.25
    %v1524 = vmul.f32 %v374, -0.25
    %v1525 = vmul.f32 %v375, -0.25
    %v1526 = vmul.f32 %v376, -0.25
    %v1527 = vmul.f32 %v377, -0.25
    %v1528 = vmul.f32 %v378, -0.25
    %v1529 = vmul.f32 %v379, -0.25
    %v1530 = vmul.f32 %v1522, 1.442695
    %v1531 = vpow.pop %v1530
    %v1532 = vmul.f32 %v1523, 1.442695
    %v1533 = vpow.pop %v1532
    %v1534 = vmul.f32 %v1524, 1.442695
    %v1535 = vpow.pop %v1534
    %v1536 = vmul.f32 %v1525, 1.442695
    %v1537 = vpow.pop %v1536
    %v1538 = vmul.f32 %v1526, 1.442695
    %v1539 = vpow.pop %v1538
    %v1540 = vmul.f32 %v1527, 1.442695
    %v1541 = vpow.pop %v1540
    %v1542 = vmul.f32 %v1528, 1.442695
    %v1543 = vpow.pop %v1542
    %v1544 = vmul.f32 %v1529, 1.442695
    %v1545 = vpow.pop %v1544
    %v1546 = vadd.f32 %v1531, %v1533
    %v1547 = vadd.f32 %v1546, %v1535
    %v1548 = vadd.f32 %v1547, %v1537
    %v1549 = vadd.f32 %v1548, %v1539
    %v1550 = vadd.f32 %v1549, %v1541
    %v1551 = vadd.f32 %v1550, %v1543
    %v1552 = vadd.f32 %v1551, %v1545
    %v1553 = vmul.f32 %v1457, %v1552
    %v1554 = vadd.f32 %v1553, 1e-09
    %v1555 = vrcp.pop %v1554
    %v1556 = vmul.f32 %v1554, %v1555
    %v1557 = vsub.f32 2.0, %v1556
    %v1558 = vmul.f32 %v1555, %v1557
    %v1559 = vmul.f32 %v1457, %v1558
    %v1560 = vmul.f32 %v1531, %v1514
    %v1561 = vmul.f32 %v1533, %v1515
    %v1562 = vmul.f32 %v1535, %v1516
    %v1563 = vmul.f32 %v1537, %v1517
    %v1564 = vmul.f32 %v1539, %v1518
    %v1565 = vmul.f32 %v1541, %v1519
    %v1566 = vmul.f32 %v1543, %v1520
    %v1567 = vmul.f32 %v1545, %v1521
    %v1568 = vadd.f32 %v1560, %v1561
    %v1569 = vadd.f32 %v1568, %v1562
    %v1570 = vadd.f32 %v1569, %v1563
    %v1571 = vadd.f32 %v1570, %v1564
    %v1572 = vadd.f32 %v1571, %v1565
    %v1573 = vadd.f32 %v1572, %v1566
    %v1574 = vadd.f32 %v1573, %v1567
    %v1575 = vmul.f32 %v1559, %v1574
    %v1576 = vadd.f32 %v1575, 1e-09
    %v1577 = vrcp.pop %v1576
    %v1578 = vmul.f32 %v1576, %v1577
    %v1579 = vsub.f32 2.0, %v1578
    %v1580 = vmul.f32 %v1577, %v1579
    %v1581 = vmul.f32 %v1457, %v1580
    %v1582 = vmin.f32 %v1581, 1.0
    %v1583 = vmul.f32 %v1559, %v1582
    %v1584 = vmul.f32 %v1560, %v1583
    %v1585 = vmul.f32 %v1561, %v1583
    %v1586 = vmul.f32 %v1562, %v1583
    %v1587 = vmul.f32 %v1563, %v1583
    %v1588 = vmul.f32 %v1564, %v1583
    %v1589 = vmul.f32 %v1565, %v1583
    %v1590 = vmul.f32 %v1566, %v1583
    %v1591 = vmul.f32 %v1567, %v1583
    %v1592 = vadd.f32 %v1447, %v1584
    %v1593 = vadd.f32 %v1448, %v1585
    %v1594 = vadd.f32 %v1449, %v1586
    %v1595 = vadd.f32 %v1450, %v1587
    %v1596 = vadd.f32 %v1451, %v1588
    %v1597 = vadd.f32 %v1452, %v1589
    %v1598 = vadd.f32 %v1453, %v1590
    %v1599 = vadd.f32 %v1454, %v1591
    %v1600 = vmul.f32 %v1583, %v1574
    %v1601 = vsub.f32 %v1457, %v1600
    %v1602 = vmax.f32 %v1601, 0.0
    %v1603 = vrot.slane %v1584, 4
    %v1604 = vadd.f32 %v1584, %v1603
    %v1605 = vrot.slane %v1604, 2
    %v1606 = vadd.f32 %v1604, %v1605
    %v1607 = vrot.slane %v1606, 1
    %v1608 = vadd.f32 %v1606, %v1607
    %v1609 = vrot.slane %v1585, 4
    %v1610 = vadd.f32 %v1585, %v1609
    %v1611 = vrot.slane %v1610, 2
    %v1612 = vadd.f32 %v1610, %v1611
    %v1613 = vrot.slane %v1612, 1
    %v1614 = vadd.f32 %v1612, %v1613
    %v1615 = vrot.slane %v1586, 4
    %v1616 = vadd.f32 %v1586, %v1615
    %v1617 = vrot.slane %v1616, 2
    %v1618 = vadd.f32 %v1616, %v1617
    %v1619 = vrot.slane %v1618, 1
    %v1620 = vadd.f32 %v1618, %v1619
    %v1621 = vrot.slane %v1587, 4
    %v1622 = vadd.f32 %v1587, %v1621
    %v1623 = vrot.slane %v1622, 2
    %v1624 = vadd.f32 %v1622, %v1623
    %v1625 = vrot.slane %v1624, 1
    %v1626 = vadd.f32 %v1624, %v1625
    %v1627 = vrot.slane %v1588, 4
    %v1628 = vadd.f32 %v1588, %v1627
    %v1629 = vrot.slane %v1628, 2
    %v1630 = vadd.f32 %v1628, %v1629
    %v1631 = vrot.slane %v1630, 1
    %v1632 = vadd.f32 %v1630, %v1631
    %v1633 = vrot.slane %v1589, 4
    %v1634 = vadd.f32 %v1589, %v1633
    %v1635 = vrot.slane %v1634, 2
    %v1636 = vadd.f32 %v1634, %v1635
    %v1637 = vrot.slane %v1636, 1
    %v1638 = vadd.f32 %v1636, %v1637
    %v1639 = vrot.slane %v1590, 4
    %v1640 = vadd.f32 %v1590, %v1639
    %v1641 = vrot.slane %v1640, 2
    %v1642 = vadd.f32 %v1640, %v1641
    %v1643 = vrot.slane %v1642, 1
    %v1644 = vadd.f32 %v1642, %v1643
    %v1645 = vrot.slane %v1591, 4
    %v1646 = vadd.f32 %v1591, %v1645
    %v1647 = vrot.slane %v1646, 2
    %v1648 = vadd.f32 %v1646, %v1647
    %v1649 = vrot.slane %v1648, 1
    %v1650 = vadd.f32 %v1648, %v1649
    %v1651 = vsub.f32 %v1514, %v1608
    %v1652 = vsub.f32 %v1515, %v1614
    %v1653 = vsub.f32 %v1516, %v1620
    %v1654 = vsub.f32 %v1517, %v1626
    %v1655 = vsub.f32 %v1518, %v1632
    %v1656 = vsub.f32 %v1519, %v1638
    %v1657 = vsub.f32 %v1520, %v1644
    %v1658 = vsub.f32 %v1521, %v1650
    %v1659 = vmax.f32 %v1651, 0.0
    %v1660 = vmax.f32 %v1652, 0.0
    %v1661 = vmax.f32 %v1653, 0.0
    %v1662 = vmax.f32 %v1654, 0.0
    %v1663 = vmax.f32 %v1655, 0.0
    %v1664 = vmax.f32 %v1656, 0.0
    %v1665 = vmax.f32 %v1657, 0.0
    %v1666 = vmax.f32 %v1658, 0.0
    %v1667 = vmul.f32 %v1602, 8.0
    %v1668 = vadd.f32 %v1667, 1e-09
    %v1669 = vrcp.pop %v1668
    %v1670 = vmul.f32 %v1668, %v1669
    %v1671 = vsub.f32 2.0, %v1670
    %v1672 = vmul.f32 %v1669, %v1671
    %v1673 = vmul.f32 %v1602, %v1672
    %v1674 = vadd.f32 %v1659, %v1660
    %v1675 = vadd.f32 %v1674, %v1661
    %v1676 = vadd.f32 %v1675, %v1662
    %v1677 = vadd.f32 %v1676, %v1663
    %v1678 = vadd.f32 %v1677, %v1664
    %v1679 = vadd.f32 %v1678, %v1665
    %v1680 = vadd.f32 %v1679, %v1666
    %v1681 = vmul.f32 %v1673, %v1680
    %v1682 = vadd.f32 %v1681, 1e-09
    %v1683 = vrcp.pop %v1682
    %v1684 = vmul.f32 %v1682, %v1683
    %v1685 = vsub.f32 2.0, %v1684
    %v1686 = vmul.f32 %v1683, %v1685
    %v1687 = vmul.f32 %v1602, %v1686
    %v1688 = vmin.f32 %v1687, 1.0
    %v1689 = vmul.f32 %v1673, %v1688
    %v1690 = vmul.f32 %v1659, %v1689
    %v1691 = vmul.f32 %v1660, %v1689
    %v1692 = vmul.f32 %v1661, %v1689
    %v1693 = vmul.f32 %v1662, %v1689
    %v1694 = vmul.f32 %v1663, %v1689
    %v1695 = vmul.f32 %v1664, %v1689
    %v1696 = vmul.f32 %v1665, %v1689
    %v1697 = vmul.f32 %v1666, %v1689
    %v1698 = vadd.f32 %v1592, %v1690
    %v1699 = vadd.f32 %v1593, %v1691
    %v1700 = vadd.f32 %v1594, %v1692
    %v1701 = vadd.f32 %v1595, %v1693
    %v1702 = vadd.f32 %v1596, %v1694
    %v1703 = vadd.f32 %v1597, %v1695
    %v1704 = vadd.f32 %v1598, %v1696
    %v1705 = vadd.f32 %v1599, %v1697
    %v1706 = vmul.f32 %v1698, %v372
    %v1707 = vmul.f32 %v1699, %v373
    %v1708 = vmul.f32 %v1700, %v374
    %v1709 = vmul.f32 %v1701, %v375
    %v1710 = vmul.f32 %v1702, %v376
    %v1711 = vmul.f32 %v1703, %v377
    %v1712 = vmul.f32 %v1704, %v378
    %v1713 = vmul.f32 %v1705, %v379
    %v1714 = vadd.f32 %v1706, %v1707
    %v1715 = vadd.f32 %v1714, %v1708
    %v1716 = vadd.f32 %v1715, %v1709
    %v1717 = vadd.f32 %v1716, %v1710
    %v1718 = vadd.f32 %v1717, %v1711
    %v1719 = vadd.f32 %v1718, %v1712
    %v1720 = vadd.f32 %v1719, %v1713
    %v1721 = vrot.slane %v1720, 4
    %v1722 = vadd.f32 %v1720, %v1721
    %v1723 = vrot.slane %v1722, 2
    %v1724 = vadd.f32 %v1722, %v1723
    %v1725 = vrot.slane %v1724, 1
    %v1726 = vadd.f32 %v1724, %v1725
    %1727 = vst [vmem:[#allocation7] sm:$0x1] %v1726
    // Predicated region
    $region18: #{tpu_custom_call.1} parent=1 // pred_check
      _
    $region19: #{tpu_custom_call.1} parent=1 // pred_check_branch
      %1729 = sbr.rel (0) target = $region21
    $region20: #{tpu_custom_call.1} parent=1 // pred_region
      %s1731 = ssub.s32 16, 16
      %1732 = vsyncadd [#allocation4], %s1731
      %s1734 = sshll.u32 [#allocation7], 4
      %s1735 = int_to_ptr.vmem [resolvable:$true] %s1734
      %1737 = dma.vmem_to_hbm [thread:$0]  %s1735, 16, %s2, [#allocation4]
    $region21: #{tpu_custom_call.1} parent=1 // pred_fallthru
      _
    // Predicated region
    $region22: #{tpu_custom_call.1} parent=1 // pred_check
      _
    $region23: #{tpu_custom_call.1} parent=1 // pred_check_branch
      %1739 = sbr.rel (0) target = $region25
    $region24: #{tpu_custom_call.1} parent=1 // pred_region
      %1740 = dma.done [#allocation4], 16
    $region25: #{tpu_custom_call.1} parent=1 // pred_fallthru
      _
    %1741 = vsyncpa [#allocation3], 1
    %1742 = vsyncpa [#allocation6], 1
    %1743 = vsyncpa [#allocation4], 1

</llo_original>
